<compile_context>
chip_gen: v7x
topology: tpu7x:2x2x1
jax: 0.10.0
libtpu: 0.0.40
codegen_flags: <defaults>
</compile_context>

<pallas_src>
import functools
import numpy as np
import jax
import jax.numpy as jnp
from jax import lax
from jax.experimental import pallas as pl
from jax.experimental.pallas import tpu as pltpu

CFG = {'PicaNet': 'GGLLL', 'Size': [28, 28, 28, 56, 112, 224],
       'Channel': [1024, 512, 512, 256, 128, 64],
       'loss_ratio': [0.5, 0.5, 0.5, 0.8, 0.8, 1]}


def _pick_vmem_limit():
    # 96 MiB on 128-MiB parts (v5e/v6e), 48 MiB on v7x (64 MiB per TC).
    try:
        cap = int(pltpu.get_tpu_info().vmem_capacity_bytes)
    except Exception:
        cap = 64 * 1024 * 1024
    return int(max(32 * 1024 * 1024, min(cap * 3 // 4, 96 * 1024 * 1024)))


VMEM_LIMIT = _pick_vmem_limit()


# ----------------------------------------------------------------------------
# tiling helpers
# ----------------------------------------------------------------------------
def _ru(x, m):
    return ((x + m - 1) // m) * m


def _tile_m(M):
    """MXU row tile; medium M is split in two so small grids still have >=2 blocks."""
    if M <= 256:
        return _ru(M, 16)
    if M <= 1024:
        if M % 2 == 0 and (M // 2) % 8 == 0:
            return M // 2
        return _ru(M, 16)
    for c in range(512, 63, -64):
        if M % c == 0:
            return c
    return 256


def _tile_n(N, K=0):
    """Lane tile: always >=128 (pad) so stores are lane-dense; 512 for deep-K wide outputs."""
    if N <= 128:
        return 128
    if K >= 4096 and N % 512 == 0:
        return 512
    if N % 256 == 0:
        return 256
    if N % 128 == 0:
        return 128
    return 128


def _tile_k(K):
    if K <= 2048:
        return K
    for c in range(2048, 127, -128):
        if K % c == 0:
            return c
    return 512


def _row_tiling(M, row_bytes=512):
    """(row_tile, padded_rows) for elementwise row-tiled kernels (~1-3 MiB blocks)."""
    cap = int(min(4096, max(1024, (3 << 20) // max(row_bytes, 1))))
    cap = (cap // 64) * 64
    if M <= cap:
        t = _ru(M, 8)
        return t, t
    for c in range(cap, 63, -64):
        if M % c == 0:
            return c, M
    return 256, _ru(M, 256)


# ----------------------------------------------------------------------------
# Pallas kernel 1: tiled matmul (bf16 MXU, f32 scratch accumulator) with fused
# bias + optional ReLU epilogue and configurable output dtype.
# ----------------------------------------------------------------------------
def _mm_kernel(a_ref, b_ref, bias_ref, o_ref, acc_ref, *, relu):
    k = pl.program_id(2)

    @pl.when(k == 0)
    def _init():
        acc_ref[...] = jnp.zeros_like(acc_ref)

    acc_ref[...] += jnp.dot(a_ref[...], b_ref[...],
                            preferred_element_type=jnp.float32)

    @pl.when(k == pl.num_programs(2) - 1)
    def _epilogue():
        y = acc_ref[...] + bias_ref[...]
        if relu:
            y = jnp.maximum(y, 0.0)
        o_ref[...] = y.astype(o_ref.dtype)


@functools.partial(jax.jit, static_argnames=("relu", "out_dtype"))
def matmul_bias_act(a, b, bias=None, relu=False, out_dtype=jnp.float32):
    """(M,K) @ (K,N) + bias (+ReLU). bf16 inputs, f32 accumulation, out_dtype output."""
    M, K = a.shape
    K2, N = b.shape
    assert K == K2
    a = a.astype(jnp.bfloat16)
    b = b.astype(jnp.bfloat16)
    if bias is None:
        bias = jnp.zeros((N,), jnp.float32)
    bias = bias.astype(jnp.float32).reshape(1, N)

    tm, tk, tn = _tile_m(M), _tile_k(K), _tile_n(N, K)
    Mp, Kp, Np = _ru(M, tm), _ru(K, tk), _ru(N, tn)
    if (Mp, Kp) != (M, K):
        a = jnp.pad(a, ((0, Mp - M), (0, Kp - K)))
    if (Kp, Np) != (K, N):
        b = jnp.pad(b, ((0, Kp - K), (0, Np - N)))
    if Np != N:
        bias = jnp.pad(bias, ((0, 0), (0, Np - N)))

    out = pl.pallas_call(
        functools.partial(_mm_kernel, relu=relu),
        out_shape=jax.ShapeDtypeStruct((Mp, Np), out_dtype),
        grid_spec=pltpu.PrefetchScalarGridSpec(
            num_scalar_prefetch=0,
            grid=(Mp // tm, Np // tn, Kp // tk),
            in_specs=[pl.BlockSpec((tm, tk), lambda i, j, k: (i, k)),
                      pl.BlockSpec((tk, tn), lambda i, j, k: (k, j)),
                      pl.BlockSpec((1, tn), lambda i, j, k: (0, j))],
            out_specs=pl.BlockSpec((tm, tn), lambda i, j, k: (i, j)),
            scratch_shapes=[pltpu.VMEM((tm, tn), jnp.float32)]),
        compiler_params=pltpu.CompilerParams(
            dimension_semantics=("parallel", "parallel", "arbitrary"),
            vmem_limit_bytes=VMEM_LIMIT),
    )(a, b, bias)
    if (Mp, Np) != (M, N):
        out = out[:M, :N]
    return out


# ----------------------------------------------------------------------------
# Pallas kernel 2: implicit-GEMM convolution (stride 1).  The whole padded
# input stays resident in VMEM; the kh*kw tap loop runs inside the kernel and
# each tap is a shifted-window slice fed to the MXU.  No im2col in HBM.
# ----------------------------------------------------------------------------
def _conv_implicit_kernel(x_ref, w_ref, bias_ref, o_ref, *, kh, kw, dil, th, ow, relu):
    C = x_ref.shape[-1]
    tn = o_ref.shape[-1]
    y0 = pl.program_id(0) * th
    acc = jnp.zeros((th * ow, tn), jnp.float32)
    for i in range(kh):
        slab = x_ref[pl.ds(y0 + i * dil, th)]              # (th, Wp, C) bf16
        for j in range(kw):
            a = slab[:, j * dil:j * dil + ow, :].reshape(th * ow, C)
            acc = acc + jnp.dot(a, w_ref[i * kw + j],
                                preferred_element_type=jnp.float32)
    y = acc + bias_ref[...]
    if relu:
        y = jnp.maximum(y, 0.0)
    o_ref[...] = y.reshape(th, ow, tn).astype(o_ref.dtype)


def _pick_th(oh, ow):
    best = 1
    for t in range(1, oh + 1):
        if oh % t == 0 and t * ow <= 2048:
            best = t
    return best


def _conv_implicit_single(x1, w, b, padding, dilation, relu, out_dtype):
    H, W_, C = x1.shape
    O, Cin, kh, kw = w.shape
    d, p = dilation, padding
    oh = H + 2 * p - d * (kh - 1)
    ow = W_ + 2 * p - d * (kw - 1)
    Hp, Wp = H + 2 * p, W_ + 2 * p
    xp = jnp.pad(x1.astype(jnp.bfloat16), ((p, p), (p, p), (0, 0)))
    Np = _ru(max(O, 128), 128)
    tn = 256 if Np % 256 == 0 else 128
    th = _pick_th(oh, ow)
    wt = jnp.transpose(w, (2, 3, 1, 0)).reshape(kh * kw, Cin, O).astype(jnp.bfloat16)
    if Np != O:
        wt = jnp.pad(wt, ((0, 0), (0, 0), (0, Np - O)))
    bias = jnp.pad(b.astype(jnp.float32), (0, Np - O)).reshape(1, Np)

    out = pl.pallas_call(
        functools.partial(_conv_implicit_kernel, kh=kh, kw=kw, dil=d,
                          th=th, ow=ow, relu=relu),
        out_shape=jax.ShapeDtypeStruct((oh, ow, Np), out_dtype),
        grid_spec=pltpu.PrefetchScalarGridSpec(
            num_scalar_prefetch=0,
            grid=(oh // th, Np // tn),
            in_specs=[pl.BlockSpec((Hp, Wp, C), lambda m, n: (0, 0, 0)),
                      pl.BlockSpec((kh * kw, Cin, tn), lambda m, n: (0, 0, n)),
                      pl.BlockSpec((1, tn), lambda m, n: (0, n))],
            out_specs=pl.BlockSpec((th, ow, tn), lambda m, n: (m, 0, n))),
        compiler_params=pltpu.CompilerParams(
            dimension_semantics=("parallel", "parallel"),
            vmem_limit_bytes=VMEM_LIMIT),
    )(xp, wt, bias)
    if Np != O:
        out = out[:, :, :O]
    return out


@functools.partial(jax.jit, static_argnames=("padding", "dilation", "relu", "out_dtype"))
def conv2d(x, w, b, padding=0, dilation=1, relu=False, out_dtype=jnp.bfloat16):
    """stride-1 conv2d, NHWC activations, PyTorch-layout (O, Cin, kh, kw) weights."""
    N, H, W_, C = x.shape
    O, Cin, kh, kw = w.shape
    oh = H + 2 * padding - dilation * (kh - 1)
    ow = W_ + 2 * padding - dilation * (kw - 1)
    if kh == 1 and kw == 1 and padding == 0:
        cols = x.reshape(N * H * W_, C)
        wmat = w.reshape(O, Cin).T
        y = matmul_bias_act(cols, wmat, b, relu=relu, out_dtype=out_dtype)
        return y.reshape(N, oh, ow, O)
    if C >= 64:
        outs = [_conv_implicit_single(x[n], w, b, padding, dilation, relu, out_dtype)
                for n in range(N)]
        return jnp.stack(outs, axis=0)
    # im2col fallback: only the tiny-channel first RGB conv takes this path.
    xb = x.astype(jnp.bfloat16)
    xp = jnp.pad(xb, ((0, 0), (padding, padding), (padding, padding), (0, 0)))
    taps = [xp[:, i * dilation:i * dilation + oh, j * dilation:j * dilation + ow, :]
            for i in range(kh) for j in range(kw)]
    cols = jnp.stack(taps, axis=3).reshape(N * oh * ow, kh * kw * C)
    wmat = jnp.transpose(w, (2, 3, 1, 0)).reshape(kh * kw * Cin, O)
    y = matmul_bias_act(cols, wmat, b, relu=relu, out_dtype=out_dtype)
    return y.reshape(N, oh, ow, O)


# ----------------------------------------------------------------------------
# Pallas kernel 3: bidirectional LSTM recurrence.  Whole time loop inside one
# kernel; both directions share one fused recurrent MXU matmul per step.
# ----------------------------------------------------------------------------
def _bilstm_kernel(xg_ref, wh_ref, of_ref, ob_ref, h_ref, c_ref, *, hid):
    T, Bp = of_ref.shape[0], of_ref.shape[1]
    h_ref[...] = jnp.zeros_like(h_ref)
    c_ref[...] = jnp.zeros_like(c_ref)

    def cell(gates, c_prev):
        i = jax.nn.sigmoid(gates[:, 0 * hid:1 * hid])
        f = jax.nn.sigmoid(gates[:, 1 * hid:2 * hid])
        g = jnp.tanh(gates[:, 2 * hid:3 * hid])
        o = jax.nn.sigmoid(gates[:, 3 * hid:4 * hid])
        c = f * c_prev + i * g
        return o * jnp.tanh(c), c

    def step(t, carry):
        tb = T - 1 - t
        # one MXU push for both directions' recurrent projections
        hh = jnp.concatenate([h_ref[0], h_ref[1]], axis=0).astype(jnp.bfloat16)
        gg = jnp.dot(hh, wh_ref[...], preferred_element_type=jnp.float32)   # (2Bp, 8H)
        gf = xg_ref[t, :, 0:4 * hid].astype(jnp.float32) + gg[:Bp, 0:4 * hid]
        gb = xg_ref[tb, :, 4 * hid:8 * hid].astype(jnp.float32) + gg[Bp:, 4 * hid:8 * hid]
        hf, cf = cell(gf, c_ref[0])
        hb, cb = cell(gb, c_ref[1])
        h_ref[0] = hf
        c_ref[0] = cf
        of_ref[t] = hf.astype(of_ref.dtype)
        h_ref[1] = hb
        c_ref[1] = cb
        ob_ref[tb] = hb.astype(ob_ref.dtype)
        return carry

    lax.fori_loop(0, T, step, 0)


@jax.jit
def bilstm(p, x):
    """nn.LSTM(batch_first=True, bidirectional=True), h0=c0=0.  (B,T,C)->(B,T,512)."""
    B, T, C = x.shape
    hid = p["w_hh"].shape[1]
    w_cat = jnp.concatenate([p["w_ih"].T, p["w_ih_r"].T], axis=1)          # (C, 8H)
    b_cat = jnp.concatenate([p["b_ih"] + p["b_hh"], p["b_ih_r"] + p["b_hh_r"]])
    xg = matmul_bias_act(x.reshape(B * T, C), w_cat, b_cat, out_dtype=jnp.bfloat16)
    xg = xg.reshape(B, T, 8 * hid).transpose(1, 0, 2)                      # (T, B, 8H)
    Bp = _ru(B, 16)
    if Bp != B:
        xg = jnp.pad(xg, ((0, 0), (0, Bp - B), (0, 0)))
    wh = jnp.concatenate([p["w_hh"].T, p["w_hh_r"].T], axis=1).astype(jnp.bfloat16)

    # TODO(synk): on v7x the fwd/bwd directions (or batch halves) could be split
    # across the 2 TensorCores; kept single-core to avoid serializing on v5e/v6e.
    of, ob = pl.pallas_call(
        functools.partial(_bilstm_kernel, hid=hid),
        out_shape=(jax.ShapeDtypeStruct((T, Bp, hid), jnp.bfloat16),
                   jax.ShapeDtypeStruct((T, Bp, hid), jnp.bfloat16)),
        grid_spec=pltpu.PrefetchScalarGridSpec(
            num_scalar_prefetch=0, grid=(1,),
            in_specs=[pl.BlockSpec((T, Bp, 8 * hid), lambda i: (0, 0, 0)),
                      pl.BlockSpec((hid, 8 * hid), lambda i: (0, 0))],
            out_specs=[pl.BlockSpec((T, Bp, hid), lambda i: (0, 0, 0)),
                       pl.BlockSpec((T, Bp, hid), lambda i: (0, 0, 0))],
            scratch_shapes=[pltpu.VMEM((2, Bp, hid), jnp.float32),
                            pltpu.VMEM((2, Bp, hid), jnp.float32)]),
        compiler_params=pltpu.CompilerParams(
            dimension_semantics=("arbitrary",),
            vmem_limit_bytes=VMEM_LIMIT),
    )(xg, wh)
    out = jnp.concatenate([of[:, :B, :], ob[:, :B, :]], axis=-1)           # (T, B, 2H)
    return out.transpose(1, 0, 2)


# ----------------------------------------------------------------------------
# Pallas kernel 4: softmax over the channel (last, lane) axis
# ----------------------------------------------------------------------------
def _softmax_kernel(x_ref, o_ref):
    x = x_ref[...].astype(jnp.float32)
    m = jnp.max(x, axis=-1, keepdims=True)
    e = jnp.exp(x - m)
    o_ref[...] = e / jnp.sum(e, axis=-1, keepdims=True)


@jax.jit
def softmax_lastdim(x):
    P, C = x.shape
    tr, Pp = _row_tiling(P, row_bytes=C * 4)
    xp = jnp.pad(x, ((0, Pp - P), (0, 0))) if Pp != P else x
    out = pl.pallas_call(
        _softmax_kernel,
        out_shape=jax.ShapeDtypeStruct((Pp, C), jnp.float32),
        grid_spec=pltpu.PrefetchScalarGridSpec(
            num_scalar_prefetch=0, grid=(Pp // tr,),
            in_specs=[pl.BlockSpec((tr, C), lambda i: (i, 0))],
            out_specs=pl.BlockSpec((tr, C), lambda i: (i, 0))),
        compiler_params=pltpu.CompilerParams(
            dimension_semantics=("parallel",),
            vmem_limit_bytes=VMEM_LIMIT),
    )(x)
    return out[:P] if Pp != P else out


# ----------------------------------------------------------------------------
# Pallas kernel 5: BatchNorm affine + ReLU (batch statistics, training mode)
# ----------------------------------------------------------------------------
def _affine_relu_kernel(x_ref, s_ref, b_ref, o_ref):
    y = x_ref[...].astype(jnp.float32) * s_ref[...] + b_ref[...]
    o_ref[...] = jnp.maximum(y, 0.0).astype(o_ref.dtype)


@jax.jit
def batchnorm_relu(x, gamma, beta):
    """Training-mode BatchNorm2d (batch stats, eps=1e-5) + ReLU, NHWC, bf16 output."""
    N, H, W_, C = x.shape
    M = N * H * W_
    xr = x.reshape(M, C)
    xf = xr.astype(jnp.float32)
    mean = jnp.mean(xf, axis=0)
    var = jnp.maximum(jnp.mean(xf * xf, axis=0) - mean * mean, 0.0)
    scale = gamma / jnp.sqrt(var + 1e-5)
    shift = beta - mean * scale
    Mw, Cw = M, C
    if C < 128 and 128 % C == 0 and M % (128 // C) == 0:
        f = 128 // C                       # fold rows so the lane dim is 128-dense
        Mw, Cw = M // f, C * f
        xr = xr.reshape(Mw, Cw)
        scale = jnp.tile(scale, f)
        shift = jnp.tile(shift, f)
    tr, Mp = _row_tiling(Mw, row_bytes=Cw * 4)
    if Mp != Mw:
        xr = jnp.pad(xr, ((0, Mp - Mw), (0, 0)))
    out = pl.pallas_call(
        _affine_relu_kernel,
        out_shape=jax.ShapeDtypeStruct((Mp, Cw), jnp.bfloat16),
        grid_spec=pltpu.PrefetchScalarGridSpec(
            num_scalar_prefetch=0, grid=(Mp // tr,),
            in_specs=[pl.BlockSpec((tr, Cw), lambda i: (i, 0)),
                      pl.BlockSpec((1, Cw), lambda i: (0, 0)),
                      pl.BlockSpec((1, Cw), lambda i: (0, 0))],
            out_specs=pl.BlockSpec((tr, Cw), lambda i: (i, 0))),
        compiler_params=pltpu.CompilerParams(
            dimension_semantics=("parallel",),
            vmem_limit_bytes=VMEM_LIMIT),
    )(xr, scale.reshape(1, Cw), shift.reshape(1, Cw))
    if Mp != Mw:
        out = out[:Mw]
    return out.reshape(N, H, W_, C)


# ----------------------------------------------------------------------------
# Pallas kernel 6: fused PiCANet-L unfold + attention apply.
# With 49 | L, the torch reshape scrambling means output positions
# [m*L/49, (m+1)*L/49) depend only on tap m, so each grid step handles one tap:
#   out[mB + r, c] = sum_{b<49} x_pad[y+2i, x+2j, c] * ksoft[m, 49r+b],  l=49r+b
# ----------------------------------------------------------------------------
def _pican_l_kernel(xh_ref, k_ref, o_ref, *, H, B):
    im = pl.program_id(1)
    xs = xh_ref[0, pl.ds(2 * im, H), :, :]                 # (H, W, C) bf16, tap window
    kk = k_ref[0]                                          # (H, W) f32 softmax weights
    w = xs.astype(jnp.float32) * kk[:, :, None]
    C = w.shape[-1]
    o_ref[...] = jnp.sum(w.reshape(B, 49, C), axis=1).astype(o_ref.dtype)


@jax.jit
def _picanet_l_single(x_hwc, k_hw49):
    H, W_, C = x_hwc.shape
    L = H * W_
    assert L % 49 == 0, "PicanetL levels have 7 | H, so 49 | H*W"
    B = L // 49
    ks = softmax_lastdim(k_hw49.reshape(L, 49))            # softmax over the 49 channels
    karr = ks.T.reshape(49, H, W_)                         # natural (tap, y, x) layout
    xp = jnp.pad(x_hwc.astype(jnp.bfloat16), ((6, 6), (6, 6), (0, 0)))
    Hp = H + 12
    # 7 horizontally pre-shifted copies; vertical shift happens in-kernel
    xh = jnp.stack([xp[:, 2 * j:2 * j + W_, :] for j in range(7)], axis=0)  # (7,Hp,W,C)
    out = pl.pallas_call(
        functools.partial(_pican_l_kernel, H=H, B=B),
        out_shape=jax.ShapeDtypeStruct((L, C), jnp.bfloat16),
        grid_spec=pltpu.PrefetchScalarGridSpec(
            num_scalar_prefetch=0, grid=(7, 7),
            in_specs=[pl.BlockSpec((1, Hp, W_, C), lambda jm, im: (jm, 0, 0, 0)),
                      pl.BlockSpec((1, H, W_), lambda jm, im: (im * 7 + jm, 0, 0))],
            out_specs=pl.BlockSpec((B, C), lambda jm, im: (im * 7 + jm, 0))),
        compiler_params=pltpu.CompilerParams(
            dimension_semantics=("parallel", "parallel"),
            vmem_limit_bytes=VMEM_LIMIT),
    )(xh, karr)
    return out.reshape(H, W_, C)


def picanet_l_forward(d, x):
    N = x.shape[0]
    w1, b1 = d['pconv1']
    w2, b2 = d['pconv2']
    k = conv2d(x, w1, b1, padding=6, dilation=2, out_dtype=jnp.bfloat16)   # (N,H,W,128)
    k = conv2d(k, w2, b2, out_dtype=jnp.float32)                           # (N,H,W,49)
    return jnp.stack([_picanet_l_single(x[n], k[n]) for n in range(N)], axis=0)


# ----------------------------------------------------------------------------
# PiCANet-G: Renet (bi-LSTMs) + matmul attention apply
# ----------------------------------------------------------------------------
def renet_forward(rp, x):
    N, H, W_, C = x.shape
    v = bilstm(rp['vert'], x.reshape(N * H, W_, C)).reshape(N, H, W_, 512)
    h = bilstm(rp['horz'], v.transpose(0, 2, 1, 3).reshape(N * W_, H, 512))
    h = h.reshape(N, W_, H, 512).transpose(0, 2, 1, 3)          # (N, H, W, 512)
    wc, bc = rp['conv']
    return conv2d(h, wc, bc, out_dtype=jnp.float32)             # (N, H, W, 100)


@jax.jit
def _picanet_g_single(x_hwc, kernel_hw100):
    H, W_, C = x_hwc.shape
    ks = softmax_lastdim(kernel_hw100.reshape(H * W_, 100))     # (L, 100)
    xs = x_hwc[::3, ::3, :].reshape(100, C)                     # 10x10 / dilation-3 taps
    return matmul_bias_act(ks, xs, out_dtype=jnp.bfloat16).reshape(H, W_, C)


def picanet_g_forward(rp, x):
    N, H, W_, C = x.shape
    assert H == 28 and W_ == 28, "PicanetG's 10x10/dilation-3 unfold pins the map to 28x28"
    kernel = renet_forward(rp, x)
    return jnp.stack([_picanet_g_single(x[n], kernel[n]) for n in range(N)], axis=0)


# ----------------------------------------------------------------------------
# plain-JAX glue: pooling, bilinear upsampling
# ----------------------------------------------------------------------------
@jax.jit
def maxpool2x2(x):
    N, H, W_, C = x.shape
    return x.reshape(N, H // 2, 2, W_ // 2, 2, C).max(axis=(2, 4))


@jax.jit
def upsample_x2_bilinear(x):
    """F.interpolate(scale_factor=2, mode='bilinear', align_corners=True), NHWC."""
    N, H, W_, C = x.shape

    def coords(n_in, n_out):
        src = jnp.arange(n_out, dtype=jnp.float32) * (n_in - 1) / (n_out - 1)
        i0 = jnp.floor(src).astype(jnp.int32)
        i1 = jnp.minimum(i0 + 1, n_in - 1)
        return i0, i1, src - i0.astype(jnp.float32)

    r0, r1, rf = coords(H, 2 * H)
    c0, c1, cf = coords(W_, 2 * W_)
    xr = x[:, r0] * (1.0 - rf)[None, :, None, None] + x[:, r1] * rf[None, :, None, None]
    y = xr[:, :, c0] * (1.0 - cf)[None, None, :, None] + xr[:, :, c1] * cf[None, None, :, None]
    return y.astype(x.dtype)


# ----------------------------------------------------------------------------
# parameter initialization (deterministic, shapes mirror the module __init__)
# ----------------------------------------------------------------------------
class KeyGen:
    def __init__(self, key):
        self.key = key

    def __call__(self):
        self.key, sub = jax.random.split(self.key)
        return sub


def conv_init(kg, out_c, in_c, kh, kw):
    fan_in = in_c * kh * kw
    w = jax.random.normal(kg(), (out_c, in_c, kh, kw), jnp.float32) * np.sqrt(2.0 / fan_in)
    b = jnp.zeros((out_c,), jnp.float32)
    return w, b


def lstm_init(kg, input_size, hidden=256):
    s = 1.0 / np.sqrt(hidden)
    p = {}
    for suf in ("", "_r"):
        p["w_ih" + suf] = jax.random.uniform(kg(), (4 * hidden, input_size), jnp.float32, -s, s)
        p["w_hh" + suf] = jax.random.uniform(kg(), (4 * hidden, hidden), jnp.float32, -s, s)
        p["b_ih" + suf] = jax.random.uniform(kg(), (4 * hidden,), jnp.float32, -s, s)
        p["b_hh" + suf] = jax.random.uniform(kg(), (4 * hidden,), jnp.float32, -s, s)
    return p


def init_params(key):
    kg = KeyGen(key)
    params = {}
    configure = [64, 64, 'M', 128, 128, 'M', 256, 256, 256, 'M',
                 512, 512, 512, 'm', 512, 512, 512, 'm']
    layers = []
    in_c = 3
    dil_flag = False
    for v in configure:
        if v == 'M':
            layers.append(('pool2',))
        elif v == 'm':
            layers.append(('pool1',))
            dil_flag = True
        else:
            pad, d = (2, 2) if dil_flag else (1, 1)
            w, b = conv_init(kg, v, in_c, 3, 3)
            layers.append(('conv', w, b, pad, d))
            layers.append(('relu',))
            in_c = v
    params['enc_layers'] = layers
    params['conv6'] = conv_init(kg, 1024, 512, 3, 3)
    params['conv7'] = conv_init(kg, 1024, 1024, 3, 3)

    chan = CFG['Channel']
    modes = CFG['PicaNet'] + 'C'
    decs = []
    for i in range(6):
        in_c = chan[i]
        out_c = chan[i + 1] if i < 5 else 1
        mode = modes[i]
        d = {'mode': mode,
             'bn_en': (jnp.ones((in_c,), jnp.float32), jnp.zeros((in_c,), jnp.float32)),
             'conv1': conv_init(kg, in_c, 2 * in_c, 1, 1)}
        if mode == 'G':
            d['renet'] = {'vert': lstm_init(kg, in_c),
                          'horz': lstm_init(kg, 512),
                          'conv': conv_init(kg, 100, 512, 1, 1)}
        elif mode == 'L':
            d['pconv1'] = conv_init(kg, 128, in_c, 7, 7)
            d['pconv2'] = conv_init(kg, 49, 128, 1, 1)
        if mode != 'C':
            d['conv2'] = conv_init(kg, out_c, 2 * in_c, 1, 1)
            d['bn_f'] = (jnp.ones((out_c,), jnp.float32), jnp.zeros((out_c,), jnp.float32))
            d['conv3'] = conv_init(kg, 1, out_c, 1, 1)
        else:
            d['conv2'] = conv_init(kg, 1, in_c, 1, 1)
        decs.append(d)
    params['dec'] = decs
    return params


# ----------------------------------------------------------------------------
# module forwards (NHWC)
# ----------------------------------------------------------------------------
def run_layers(layers, x):
    i = 0
    while i < len(layers):
        l = layers[i]
        if l[0] == 'conv':
            fuse = i + 1 < len(layers) and layers[i + 1][0] == 'relu'
            x = conv2d(x, l[1], l[2], padding=l[3], dilation=l[4], relu=fuse,
                       out_dtype=jnp.bfloat16)
            i += 2 if fuse else 1
        elif l[0] == 'relu':
            x = jnp.maximum(x, 0.0)
            i += 1
        elif l[0] == 'pool2':
            x = maxpool2x2(x)
            i += 1
        else:                               # 'pool1': MaxPool2d(kernel=1, stride=1) == identity
            i += 1
    return x


def encoder_forward(P, x):
    L = P['enc_layers']
    c1 = run_layers(L[0:4], x)
    c2 = run_layers(L[4:9], c1)
    c3 = run_layers(L[9:16], c2)
    c4 = run_layers(L[16:23], c3)
    c5 = run_layers(L[23:], c4)
    w6, b6 = P['conv6']
    w7, b7 = P['conv7']
    c6 = conv2d(c5, w6, b6, padding=12, dilation=12, out_dtype=jnp.bfloat16)
    c7 = conv2d(c6, w7, b7, padding=1, dilation=1, out_dtype=jnp.bfloat16)
    return (c1, c2, c3, c4, c5, c7)


def decoder_cell_forward(d, en, dec):
    mode = d['mode']
    if dec is None:
        dec = en
    if dec.shape[1] * 2 == en.shape[1]:
        dec = upsample_x2_bilinear(dec)
    elif dec.shape[1] != en.shape[1]:
        raise AssertionError
    g, b = d['bn_en']
    en = batchnorm_relu(en, g, b)
    fmap = jnp.concatenate([en.astype(jnp.bfloat16), dec.astype(jnp.bfloat16)], axis=-1)
    w1, b1 = d['conv1']
    fmap = conv2d(fmap, w1, b1, relu=True, out_dtype=jnp.bfloat16)
    if mode != 'C':
        if mode == 'G':
            fmap_att = picanet_g_forward(d['renet'], fmap)
        else:
            fmap_att = picanet_l_forward(d, fmap)
        z = jnp.concatenate([fmap, fmap_att.astype(jnp.bfloat16)], axis=-1)
        w2, b2 = d['conv2']
        z = conv2d(z, w2, b2, out_dtype=jnp.bfloat16)
        gf, bf = d['bn_f']
        dec_out = batchnorm_relu(z, gf, bf)
        w3, b3 = d['conv3']
        y = jax.nn.sigmoid(conv2d(dec_out, w3, b3, out_dtype=jnp.float32))
    else:
        w2, b2 = d['conv2']
        dec_out = conv2d(fmap, w2, b2, out_dtype=jnp.float32)
        y = jax.nn.sigmoid(dec_out)
    return dec_out, y


def unet_forward(P, x_nchw):
    x = jnp.transpose(x_nchw, (0, 2, 3, 1))                    # NCHW input -> NHWC internally
    en_out = encoder_forward(P, x)
    dec = None
    preds = []
    for i in range(6):
        dec, y = decoder_cell_forward(P['dec'][i], en_out[5 - i], dec)
        preds.append(jnp.transpose(y, (0, 3, 1, 2)))           # predictions back to NCHW
    # TODO(synk): training-path binary_cross_entropy loss (non test_mode) not implemented.
    loss = 0.0
    return preds, loss


# ----------------------------------------------------------------------------
if __name__ == "__main__":
    root = jax.random.PRNGKey(0)
    pkey, xkey = jax.random.split(root)
    params = init_params(pkey)
    # Smallest configuration consistent with the module: batch=1, 3x224x224
    # (resolution is pinned by PicanetG's 10x10 / dilation-3 unfold at 28x28).
    x = jax.random.normal(xkey, (1, 3, 224, 224), jnp.float32)

    preds, loss = unet_forward(params, x)   # test_mode forward (tar=None)

    expected = [(1, 1, 28, 28), (1, 1, 28, 28), (1, 1, 28, 28),
                (1, 1, 56, 56), (1, 1, 112, 112), (1, 1, 224, 224)]
    for p_, s_ in zip(preds, expected):
        assert p_.shape == s_, (p_.shape, s_)
        assert bool(jnp.all(jnp.isfinite(p_)))
    jax.block_until_ready(preds)
    print("KERNEL_OK")
</pallas_src>

<mosaic_0001>
module attributes {stable_mosaic.version = 11 : i64} {
  func.func @_mm_kernel(%arg0: i32, %arg1: i32, %arg2: i32, %arg3: memref<512x27xbf16, #tpu.memory_space<vmem>>, %arg4: memref<27x128xbf16, #tpu.memory_space<vmem>>, %arg5: memref<1x128xf32, #tpu.memory_space<vmem>>, %arg6: memref<512x128xbf16, #tpu.memory_space<vmem>>, %arg7: memref<512x128xf32, #tpu.memory_space<vmem>>) attributes {dimension_semantics = [#tpu.dimension_semantics<parallel>, #tpu.dimension_semantics<parallel>, #tpu.dimension_semantics<arbitrary>], iteration_bounds = array<i64: 98, 1, 1>, scalar_prefetch = 0 : i64, scratch_operands = 1 : i64, tpu.core_type = #tpu.core_type<tc>, window_params = [{transform_indices = @transform_0, window_bounds = array<i64: 512, 27>}, {transform_indices = @transform_1, window_bounds = array<i64: 27, 128>}, {transform_indices = @transform_2, window_bounds = array<i64: 1, 128>}, {transform_indices = @transform_3, window_bounds = array<i64: 512, 128>}]} {
    %c0_i32 = arith.constant 0 : i32
    %0 = arith.cmpi eq, %arg2, %c0_i32 : i32
    %1 = arith.extui %0 : i1 to i32
    %c0_i32_0 = arith.constant 0 : i32
    %2 = arith.cmpi ne, %1, %c0_i32_0 : i32
    scf.if %2 {
      %cst_10 = arith.constant 0.000000e+00 : f32
      %12 = vector.broadcast %cst_10 : f32 to vector<512x128xf32>
      %c0_11 = arith.constant 0 : index
      %c0_12 = arith.constant 0 : index
      %13 = vector.load %arg7[%c0_11, %c0_12] : memref<512x128xf32, #tpu.memory_space<vmem>>, vector<512x128xf32>
      tpu.vector_store %arg7[%c0_11, %c0_12], %12 {strides = array<i32>} : memref<512x128xf32, #tpu.memory_space<vmem>>, vector<512x128xf32>,
    } else {
    }
    %c0 = arith.constant 0 : index
    %c0_1 = arith.constant 0 : index
    %3 = vector.load %arg7[%c0, %c0_1] : memref<512x128xf32, #tpu.memory_space<vmem>>, vector<512x128xf32>
    %c0_2 = arith.constant 0 : index
    %c0_3 = arith.constant 0 : index
    %4 = vector.load %arg3[%c0_2, %c0_3] : memref<512x27xbf16, #tpu.memory_space<vmem>>, vector<512x27xbf16>
    %c0_4 = arith.constant 0 : index
    %c0_5 = arith.constant 0 : index
    %5 = vector.load %arg4[%c0_4, %c0_5] : memref<27x128xbf16, #tpu.memory_space<vmem>>, vector<27x128xbf16>
    %cst = arith.constant dense<0.000000e+00> : vector<512x128xf32>
    %6 = tpu.matmul %4, %5, %cst {dimension_numbers = #tpu.dot_dimension_numbers<[1], [0], [0], [1], [0, 0, 1, 1], [], []>} : vector<512x27xbf16>, vector<27x128xbf16>, vector<512x128xf32> -> vector<512x128xf32>
    %7 = arith.addf %3, %6 : vector<512x128xf32>
    %c0_6 = arith.constant 0 : index
    %c0_7 = arith.constant 0 : index
    %8 = vector.load %arg7[%c0_6, %c0_7] : memref<512x128xf32, #tpu.memory_space<vmem>>, vector<512x128xf32>
    tpu.vector_store %arg7[%c0_6, %c0_7], %7 {strides = array<i32>} : memref<512x128xf32, #tpu.memory_space<vmem>>, vector<512x128xf32>,
    %c0_i32_8 = arith.constant 0 : i32
    %9 = arith.cmpi eq, %arg2, %c0_i32_8 : i32
    %10 = arith.extui %9 : i1 to i32
    %c0_i32_9 = arith.constant 0 : i32
    %11 = arith.cmpi ne, %10, %c0_i32_9 : i32
    scf.if %11 {
      %c0_10 = arith.constant 0 : index
      %c0_11 = arith.constant 0 : index
      %12 = vector.load %arg7[%c0_10, %c0_11] : memref<512x128xf32, #tpu.memory_space<vmem>>, vector<512x128xf32>
      %c0_12 = arith.constant 0 : index
      %c0_13 = arith.constant 0 : index
      %13 = vector.load %arg5[%c0_12, %c0_13] : memref<1x128xf32, #tpu.memory_space<vmem>>, vector<1x128xf32>
      %14 = vector.broadcast %13 : vector<1x128xf32> to vector<512x128xf32>
      %15 = arith.addf %12, %14 : vector<512x128xf32>
      %cst_14 = arith.constant 0.000000e+00 : f32
      %16 = vector.broadcast %cst_14 : f32 to vector<512x128xf32>
      %17 = arith.maximumf %15, %16 : vector<512x128xf32>
      %18 = arith.truncf %17 : vector<512x128xf32> to vector<512x128xbf16>
      %c0_15 = arith.constant 0 : index
      %c0_16 = arith.constant 0 : index
      %19 = vector.load %arg6[%c0_15, %c0_16] : memref<512x128xbf16, #tpu.memory_space<vmem>>, vector<512x128xbf16>
      tpu.vector_store %arg6[%c0_15, %c0_16], %18 {strides = array<i32>} : memref<512x128xbf16, #tpu.memory_space<vmem>>, vector<512x128xbf16>,
    } else {
    }
    return
  }
  func.func @transform_0(%arg0: i32, %arg1: i32, %arg2: i32) -> (i32, i32) {
    %c0_i32 = arith.constant 0 : i32
    return %arg0, %arg2 : i32, i32
  }
  func.func @transform_1(%arg0: i32, %arg1: i32, %arg2: i32) -> (i32, i32) {
    %c0_i32 = arith.constant 0 : i32
    return %arg2, %arg1 : i32, i32
  }
  func.func @transform_2(%arg0: i32, %arg1: i32, %arg2: i32) -> (i32, i32) {
    %c0_i32 = arith.constant 0 : i32
    %c0_i32_0 = arith.constant 0 : i32
    return %c0_i32, %arg1 : i32, i32
  }
  func.func @transform_3(%arg0: i32, %arg1: i32, %arg2: i32) -> (i32, i32) {
    %c0_i32 = arith.constant 0 : i32
    return %arg0, %arg1 : i32, i32
  }
}

</mosaic_0001>

<llo_original>
// kernel: matmul_bias_act.1
$region0: #{matmul_bias_act.1}
  #allocation0 [shape = 'u32[]', space=smem, size = 0x4, offset = 0x4, fixed_abs, tag = 'smem constant byte address 0x4 - core index']
  #allocation1 [shape = 'u32[144,128]{1,0:T(1,128)}', space=vmem, size = 0x12000, scoped, tag = 'internal scratch']
  #allocation2 [shape = 'f32[512,128]{1,0:T(8,128)}', space=vmem, size = 0x40000, scoped, tag = 'scratch operand']
  %s0 = inlined_call_operand.hbm [shape: bf16[50176,27], index: 0, kind: input, shape index: {}]
  %s1 = inlined_call_operand.vmem [shape: bf16[27,128], index: 1, kind: input, shape index: {}]
  %s2 = inlined_call_operand.vmem [shape: f32[1,128], index: 2, kind: input, shape index: {}]
  %s3 = inlined_call_operand.vmem [shape: bf16[50176,128], index: 3, kind: output, shape index: {}]
  %s4 = sld [smem:[#allocation0]]
  $region57: #{matmul_bias_act.1} parent=0
    _
  %s6 = ssub.s32 1, %s4
  %s7 = scalar_select 0, %s6, %s4
  $region1: #{matmul_bias_act.1} parent=0
    #allocation3 [shape = 'u8[262144]{0}', space=vmem, size = 0x40000, scoped, tag = 'input window, operand 0']
    #allocation4 [shape = 's32[2]{0}', space=sflag, size = 0x8, scoped, tag = 'scoped memory for matmul_bias_act.1']
    %8 = vsyncpa [#allocation4], 0
    %s9 = scalar_lea.sflag [#allocation4], 1
    %10 = vsyncpa %s9, 0
    loop: start=0, step=1, limit=100
    $region2: #{matmul_bias_act.1} parent=1 // loop_pre_header
      _
    $region3: #{matmul_bias_act.1} parent=1 // loop_header
      %s12 = sphi 0, %s16
      %p13 = scmp.ge.s32.totalorder %s12, 100
      %s19 = sphi 0, %s38
      %s20 = sphi 0, %s34
      %s21 = sphi 0, %s30
      %s22 = sphi 0, %s19
      %s23 = sphi 0, %s20
      %s24 = sphi 0, %s21
      %s25 = sphi 0, %s22
      %s26 = sphi 0, %s23
      %s27 = sphi 0, %s24
      %s43 = sphi 0, %s45
      %s46 = sphi 0, %s43
      %s47 = sphi 0, %s46
      %s63 = sphi 0, %s47
      %s71 = sphi 0, %s73
      %s74 = sphi 0, %s71
      %s75 = sphi 0, %s74
      %s91 = sphi 0, %s75
      %s97 = sphi 0, %s99
      %s100 = sphi 0, %s97
      %s101 = sphi 0, %s100
      %s117 = sphi 0, %s101
      %s125 = sphi 0, %s127
      %s128 = sphi 0, %s125
      %s129 = sphi 0, %s128
      %s145 = sphi 0, %s129
    $region4: #{matmul_bias_act.1} parent=1 // loop_header_branch
      %15 = sbr.rel (%p13) target = $region8
    $region5: #{matmul_bias_act.1} parent=1 // loop_body
      %s17 = ssub.s32 %s12, 1
      %s18 = ssub.s32 %s12, 2
      %s28 = sadd.s32 1, %s21
      %p29 = scmp.ge.s32.totalorder %s28, 1
      %s30 = scalar_select %p29, 0, %s28
      %s31 = sadd.s32 1, %s20
      %s32 = scalar_select %p29, %s31, %s20
      %p33 = scmp.ge.s32.totalorder %s32, 1
      %s34 = scalar_select %p33, 0, %s32
      %s35 = sadd.s32 1, %s19
      %s36 = scalar_select %p33, %s35, %s19
      %p37 = scmp.ge.s32.totalorder %s36, 98
      %s38 = scalar_select %p37, 0, %s36
      %s39 = ssub.s32 %s19, %s38
      %s40 = ssub.s32 %s21, %s30
      %s41 = sor.u32 %s39, %s40
      %p42 = scmp.eq.s32.totalorder %s41, 0
      %s44 = sadd.s32 %s43, 1
      %s45 = scalar_select %p42, %s43, %s44
      %p48 = pneg %p42
      %p49 = scmp.eq.s32.totalorder %s12, 97
      %p50 = por %p48, %p49
      %p51 = scmp.ne.s32.totalorder %s43, %s46
      %p52 = scmp.eq.s32.totalorder %s12, 0
      %p53 = por %p51, %p52
      %p54 = scmp.ne.s32.totalorder %s43, %s46
      %p55 = scmp.eq.s32.totalorder %s17, 97
      %p56 = por %p54, %p55
      %p57 = scmp.ne.s32.totalorder %s46, %s47
      %p58 = scmp.eq.s32.totalorder %s17, 0
      %p59 = por %p57, %p58
      %p60 = scmp.ne.s32.totalorder %s46, %s47
      %p61 = scmp.eq.s32.totalorder %s18, 97
      %p62 = por %p60, %p61
      %p64 = scmp.ne.s32.totalorder %s47, %s63
      %p65 = scmp.eq.s32.totalorder %s18, 0
      %p66 = por %p64, %p65
      %s67 = ssub.s32 %s21, %s30
      %s68 = ssub.s32 %s20, %s34
      %s69 = sor.u32 %s67, %s68
      %p70 = scmp.eq.s32.totalorder %s69, 0
      %s72 = sadd.s32 %s71, 1
      %s73 = scalar_select %p70, %s71, %s72
      %p76 = pneg %p70
      %p77 = scmp.eq.s32.totalorder %s12, 97
      %p78 = por %p76, %p77
      %p79 = scmp.ne.s32.totalorder %s71, %s74
      %p80 = scmp.eq.s32.totalorder %s12, 0
      %p81 = por %p79, %p80
      %p82 = scmp.ne.s32.totalorder %s71, %s74
      %p83 = scmp.eq.s32.totalorder %s17, 97
      %p84 = por %p82, %p83
      %p85 = scmp.ne.s32.totalorder %s74, %s75
      %p86 = scmp.eq.s32.totalorder %s17, 0
      %p87 = por %p85, %p86
      %p88 = scmp.ne.s32.totalorder %s74, %s75
      %p89 = scmp.eq.s32.totalorder %s18, 97
      %p90 = por %p88, %p89
      %p92 = scmp.ne.s32.totalorder %s75, %s91
      %p93 = scmp.eq.s32.totalorder %s18, 0
      %p94 = por %p92, %p93
      %s95 = ssub.s32 %s20, %s34
      %p96 = scmp.eq.s32.totalorder %s95, 0
      %s98 = sadd.s32 %s97, 1
      %s99 = scalar_select %p96, %s97, %s98
      %p102 = pneg %p96
      %p103 = scmp.eq.s32.totalorder %s12, 97
      %p104 = por %p102, %p103
      %p105 = scmp.ne.s32.totalorder %s97, %s100
      %p106 = scmp.eq.s32.totalorder %s12, 0
      %p107 = por %p105, %p106
      %p108 = scmp.ne.s32.totalorder %s97, %s100
      %p109 = scmp.eq.s32.totalorder %s17, 97
      %p110 = por %p108, %p109
      %p111 = scmp.ne.s32.totalorder %s100, %s101
      %p112 = scmp.eq.s32.totalorder %s17, 0
      %p113 = por %p111, %p112
      %p114 = scmp.ne.s32.totalorder %s100, %s101
      %p115 = scmp.eq.s32.totalorder %s18, 97
      %p116 = por %p114, %p115
      %p118 = scmp.ne.s32.totalorder %s101, %s117
      %p119 = scmp.eq.s32.totalorder %s18, 0
      %p120 = por %p118, %p119
      %s121 = ssub.s32 %s19, %s38
      %s122 = ssub.s32 %s20, %s34
      %s123 = sor.u32 %s121, %s122
      %p124 = scmp.eq.s32.totalorder %s123, 0
      %s126 = sadd.s32 %s125, 1
      %s127 = scalar_select %p124, %s125, %s126
      %p130 = pneg %p124
      %p131 = scmp.eq.s32.totalorder %s12, 97
      %p132 = por %p130, %p131
      %p133 = scmp.ne.s32.totalorder %s125, %s128
      %p134 = scmp.eq.s32.totalorder %s12, 0
      %p135 = por %p133, %p134
      %p136 = scmp.ne.s32.totalorder %s125, %s128
      %p137 = scmp.eq.s32.totalorder %s17, 97
      %p138 = por %p136, %p137
      %p139 = scmp.ne.s32.totalorder %s128, %s129
      %p140 = scmp.eq.s32.totalorder %s17, 0
      %p141 = por %p139, %p140
      %p142 = scmp.ne.s32.totalorder %s128, %s129
      %p143 = scmp.eq.s32.totalorder %s18, 97
      %p144 = por %p142, %p143
      %p146 = scmp.ne.s32.totalorder %s129, %s145
      %p147 = scmp.eq.s32.totalorder %s18, 0
      %p148 = por %p146, %p147
      %p149 = scmp.le.s32.totalorder 1, %s12
      %p150 = scmp.lt.s32.totalorder %s12, 99
      %p151 = pnand %p149, %p150
      %p152 = pneg %p151
      // Predicated region
      $region9: #{matmul_bias_act.1} parent=5 // pred_check
        _
      $region10: #{matmul_bias_act.1} parent=5 // pred_check_branch
        %154 = sbr.rel (%p151) target = $region12
      $region11: #{matmul_bias_act.1} parent=5 // pred_region
        %s155 = ssub.s32 %s12, 1
        // Predicated region
        $region13: #{matmul_bias_act.1} parent=11 // pred_check
          %p156 = pneg %p87
        $region14: #{matmul_bias_act.1} parent=11 // pred_check_branch
          %158 = sbr.rel (%p156) target = $region16
        $region15: #{matmul_bias_act.1} parent=11 // pred_region
          %s159 = smul.u32 4, %s24
          %p160 = scmp.lt.s32.totalorder %s159, 3
          %s161 = scalar_select %p160, %s159, 3
          %p162 = scmp.lt.s32.totalorder %s23, 0
          %s163 = scalar_select %p162, %s23, 0
          %s164 = sadd.s32 %s163, %s161
          %s165 = smul.addr %s164, 4
          %s166 = scalar_lea.vmem %s1, %s165
          %s167 = smul.u32 4, %s24
        $region16: #{matmul_bias_act.1} parent=11 // pred_fallthru
          _
        // Predicated region
        $region17: #{matmul_bias_act.1} parent=11 // pred_check
          %p168 = pneg %p113
        $region18: #{matmul_bias_act.1} parent=11 // pred_check_branch
          %170 = sbr.rel (%p168) target = $region20
        $region19: #{matmul_bias_act.1} parent=11 // pred_region
          %p171 = scmp.lt.s32.totalorder %s23, 0
          %s172 = scalar_select %p171, %s23, 0
          %s173 = scalar_lea.vmem %s2, %s172
        $region20: #{matmul_bias_act.1} parent=11 // pred_fallthru
          _
      $region12: #{matmul_bias_act.1} parent=5 // pred_fallthru
        _
      %p174 = scmp.lt.s32.totalorder %s12, 98
      // Predicated region
      $region21: #{matmul_bias_act.1} parent=5 // pred_check
        %p175 = pneg %p174
      $region22: #{matmul_bias_act.1} parent=5 // pred_check_branch
        %177 = sbr.rel (%p175) target = $region24
      $region23: #{matmul_bias_act.1} parent=5 // pred_region
        // Predicated region
        $region25: #{matmul_bias_act.1} parent=23 // pred_check
          %p178 = pneg %p53
        $region26: #{matmul_bias_act.1} parent=23 // pred_check_branch
          %180 = sbr.rel (%p178) target = $region28
        $region27: #{matmul_bias_act.1} parent=23 // pred_region
          %s181 = sand.u32 %s43, 1
          %s182 = scalar_lea.sflag [#allocation4], %s181
          %s183 = sand.u32 %s43, 1
          %s184 = smul.addr %s183, 256
          %s185 = scalar_lea.vmem [#allocation3], %s184
          %s186 = smul.u32 64, %s19
          %s188 = ssub.s32 4096, 4096
          %189 = vsyncadd %s182, %s188
          %s190 = sadd.s32 %s21, %s186
          %s191 = smul.addr %s190, 64
          %s192 = scalar_lea.hbm %s0, %s191
          %s193 = sshll.u32 %s185, 4
          %s194 = int_to_ptr.vmem [resolvable:$true] %s193
          %199 = dma.hbm_to_vmem [thread:$0]  %s192, 4096, %s194, %s182, 64, 64, 4
        $region28: #{matmul_bias_act.1} parent=23 // pred_fallthru
          _
      $region24: #{matmul_bias_act.1} parent=5 // pred_fallthru
        _
      %p200 = scmp.le.s32.totalorder 1, %s12
      %p201 = scmp.lt.s32.totalorder %s12, 99
      %p202 = pnand %p200, %p201
      %p203 = pneg %p202
      // Predicated region
      $region29: #{matmul_bias_act.1} parent=5 // pred_check
        _
      $region30: #{matmul_bias_act.1} parent=5 // pred_check_branch
        %205 = sbr.rel (%p202) target = $region32
      $region31: #{matmul_bias_act.1} parent=5 // pred_region
        %s206 = ssub.s32 %s12, 1
        %s207 = sand.u32 %s46, 1
        %s208 = scalar_lea.sflag [#allocation4], %s207
        %s209 = sand.u32 %s46, 1
        %s210 = smul.addr %s209, 256
        %s211 = scalar_lea.vmem [#allocation3], %s210
        // Predicated region
        $region33: #{matmul_bias_act.1} parent=31 // pred_check
          %p212 = pneg %p59
        $region34: #{matmul_bias_act.1} parent=31 // pred_check_branch
          %214 = sbr.rel (%p212) target = $region36
        $region35: #{matmul_bias_act.1} parent=31 // pred_region
          %215 = dma.done %s208, 4096
        $region36: #{matmul_bias_act.1} parent=31 // pred_fallthru
          _
        %s216 = sand.u32 %s46, 1
        %s217 = scalar_lea.sflag [#allocation4], %s216
        %s218 = sand.u32 %s46, 1
        %s219 = smul.addr %s218, 256
        %s220 = scalar_lea.vmem [#allocation3], %s219
        %p221 = pneg %p59
        %p222 = pneg %p56
        %s223 = smul.u32 4, %s24
        %p224 = scmp.lt.s32.totalorder %s223, 3
        %s225 = scalar_select %p224, %s223, 3
        %p226 = scmp.lt.s32.totalorder %s23, 0
        %s227 = scalar_select %p226, %s23, 0
        %s228 = sadd.s32 %s227, %s225
        %s229 = smul.addr %s228, 4
        %s230 = scalar_lea.vmem %s1, %s229
        %p231 = pneg %p87
        %p232 = pneg %p84
        %p233 = scmp.lt.s32.totalorder %s23, 0
        %s234 = scalar_select %p233, %s23, 0
        %s235 = scalar_lea.vmem %s2, %s234
        %p236 = pneg %p113
        %p237 = pneg %p110
        %p238 = pneg %p141
        %p239 = pneg %p138
        %s240 = smul.u32 64, %s22
        %p241 = scmp.lt.s32.totalorder %s240, 6271
        %s242 = scalar_select %p241, %s240, 6271
        %p243 = scmp.lt.s32.totalorder %s23, 0
        %s244 = scalar_select %p243, %s23, 0
        %s245 = sadd.s32 %s244, %s242
        %s246 = smul.addr %s245, 4
        %s247 = scalar_lea.vmem %s3, %s246
        %s248 = smul.u32 64, %s22
        %s249 = smul.u32 4, %s24
        %p250 = scmp.lt.s32.totalorder %s249, 3
        %s251 = scalar_select %p250, %s249, 3
        %p252 = scmp.lt.s32.totalorder %s23, 0
        %s253 = scalar_select %p252, %s23, 0
        %s254 = sadd.s32 %s253, %s251
        %s255 = smul.addr %s254, 4
        %s256 = scalar_lea.vmem %s1, %s255
        %s257 = smul.u32 4, %s24
        %p258 = scmp.lt.s32.totalorder %s23, 0
        %s259 = scalar_select %p258, %s23, 0
        %s260 = scalar_lea.vmem %s2, %s259
        %s261 = smul.u32 64, %s22
        %p262 = scmp.lt.s32.totalorder %s261, 6271
        %s263 = scalar_select %p262, %s261, 6271
        %p264 = scmp.lt.s32.totalorder %s23, 0
        %s265 = scalar_select %p264, %s23, 0
        %s266 = sadd.s32 %s265, %s263
        %s267 = smul.addr %s266, 4
        %s268 = scalar_lea.vmem %s3, %s267
        %s269 = smul.u32 64, %s22
        %p271 = scmp.eq.s32.totalorder %s24, 0
        // Predicated region
        $region37: #{matmul_bias_act.1} parent=31 // pred_check
          %p272 = pneg %p271
        $region38: #{matmul_bias_act.1} parent=31 // pred_check_branch
          %274 = sbr.rel (%p272) target = $region40
        $region39: #{matmul_bias_act.1} parent=31 // pred_region
          %275 = vst [vmem:[#allocation2] sm:$0xff] 0.0
          %276 = vst [vmem:[#allocation2 + $0x8] sm:$0xff] 0.0
          %277 = vst [vmem:[#allocation2 + $0x10] sm:$0xff] 0.0
          %278 = vst [vmem:[#allocation2 + $0x18] sm:$0xff] 0.0
          %279 = vst [vmem:[#allocation2 + $0x20] sm:$0xff] 0.0
          %280 = vst [vmem:[#allocation2 + $0x28] sm:$0xff] 0.0
          %281 = vst [vmem:[#allocation2 + $0x30] sm:$0xff] 0.0
          %282 = vst [vmem:[#allocation2 + $0x38] sm:$0xff] 0.0
          %283 = vst [vmem:[#allocation2 + $0x40] sm:$0xff] 0.0
          %284 = vst [vmem:[#allocation2 + $0x48] sm:$0xff] 0.0
          %285 = vst [vmem:[#allocation2 + $0x50] sm:$0xff] 0.0
          %286 = vst [vmem:[#allocation2 + $0x58] sm:$0xff] 0.0
          %287 = vst [vmem:[#allocation2 + $0x60] sm:$0xff] 0.0
          %288 = vst [vmem:[#allocation2 + $0x68] sm:$0xff] 0.0
          %289 = vst [vmem:[#allocation2 + $0x70] sm:$0xff] 0.0
          %290 = vst [vmem:[#allocation2 + $0x78] sm:$0xff] 0.0
          %291 = vst [vmem:[#allocation2 + $0x80] sm:$0xff] 0.0
          %292 = vst [vmem:[#allocation2 + $0x88] sm:$0xff] 0.0
          %293 = vst [vmem:[#allocation2 + $0x90] sm:$0xff] 0.0
          %294 = vst [vmem:[#allocation2 + $0x98] sm:$0xff] 0.0
          %295 = vst [vmem:[#allocation2 + $0xa0] sm:$0xff] 0.0
          %296 = vst [vmem:[#allocation2 + $0xa8] sm:$0xff] 0.0
          %297 = vst [vmem:[#allocation2 + $0xb0] sm:$0xff] 0.0
          %298 = vst [vmem:[#allocation2 + $0xb8] sm:$0xff] 0.0
          %299 = vst [vmem:[#allocation2 + $0xc0] sm:$0xff] 0.0
          %300 = vst [vmem:[#allocation2 + $0xc8] sm:$0xff] 0.0
          %301 = vst [vmem:[#allocation2 + $0xd0] sm:$0xff] 0.0
          %302 = vst [vmem:[#allocation2 + $0xd8] sm:$0xff] 0.0
          %303 = vst [vmem:[#allocation2 + $0xe0] sm:$0xff] 0.0
          %304 = vst [vmem:[#allocation2 + $0xe8] sm:$0xff] 0.0
          %305 = vst [vmem:[#allocation2 + $0xf0] sm:$0xff] 0.0
          %306 = vst [vmem:[#allocation2 + $0xf8] sm:$0xff] 0.0
          %307 = vst [vmem:[#allocation2 + $0x100] sm:$0xff] 0.0
          %308 = vst [vmem:[#allocation2 + $0x108] sm:$0xff] 0.0
          %309 = vst [vmem:[#allocation2 + $0x110] sm:$0xff] 0.0
          %310 = vst [vmem:[#allocation2 + $0x118] sm:$0xff] 0.0
          %311 = vst [vmem:[#allocation2 + $0x120] sm:$0xff] 0.0
          %312 = vst [vmem:[#allocation2 + $0x128] sm:$0xff] 0.0
          %313 = vst [vmem:[#allocation2 + $0x130] sm:$0xff] 0.0
          %314 = vst [vmem:[#allocation2 + $0x138] sm:$0xff] 0.0
          %315 = vst [vmem:[#allocation2 + $0x140] sm:$0xff] 0.0
          %316 = vst [vmem:[#allocation2 + $0x148] sm:$0xff] 0.0
          %317 = vst [vmem:[#allocation2 + $0x150] sm:$0xff] 0.0
          %318 = vst [vmem:[#allocation2 + $0x158] sm:$0xff] 0.0
          %319 = vst [vmem:[#allocation2 + $0x160] sm:$0xff] 0.0
          %320 = vst [vmem:[#allocation2 + $0x168] sm:$0xff] 0.0
          %321 = vst [vmem:[#allocation2 + $0x170] sm:$0xff] 0.0
          %322 = vst [vmem:[#allocation2 + $0x178] sm:$0xff] 0.0
          %323 = vst [vmem:[#allocation2 + $0x180] sm:$0xff] 0.0
          %324 = vst [vmem:[#allocation2 + $0x188] sm:$0xff] 0.0
          %325 = vst [vmem:[#allocation2 + $0x190] sm:$0xff] 0.0
          %326 = vst [vmem:[#allocation2 + $0x198] sm:$0xff] 0.0
          %327 = vst [vmem:[#allocation2 + $0x1a0] sm:$0xff] 0.0
          %328 = vst [vmem:[#allocation2 + $0x1a8] sm:$0xff] 0.0
          %329 = vst [vmem:[#allocation2 + $0x1b0] sm:$0xff] 0.0
          %330 = vst [vmem:[#allocation2 + $0x1b8] sm:$0xff] 0.0
          %331 = vst [vmem:[#allocation2 + $0x1c0] sm:$0xff] 0.0
          %332 = vst [vmem:[#allocation2 + $0x1c8] sm:$0xff] 0.0
          %333 = vst [vmem:[#allocation2 + $0x1d0] sm:$0xff] 0.0
          %334 = vst [vmem:[#allocation2 + $0x1d8] sm:$0xff] 0.0
          %335 = vst [vmem:[#allocation2 + $0x1e0] sm:$0xff] 0.0
          %336 = vst [vmem:[#allocation2 + $0x1e8] sm:$0xff] 0.0
          %337 = vst [vmem:[#allocation2 + $0x1f0] sm:$0xff] 0.0
          %338 = vst [vmem:[#allocation2 + $0x1f8] sm:$0xff] 0.0
        $region40: #{matmul_bias_act.1} parent=31 // pred_fallthru
          _
        %v339 = vld [vmem:[#allocation2] sm:$0xff]
        %v340 = vld [vmem:[#allocation2 + $0x8] sm:$0xff]
        %v341 = vld [vmem:[#allocation2 + $0x10] sm:$0xff]
        %v342 = vld [vmem:[#allocation2 + $0x18] sm:$0xff]
        %v343 = vld [vmem:[#allocation2 + $0x20] sm:$0xff]
        %v344 = vld [vmem:[#allocation2 + $0x28] sm:$0xff]
        %v345 = vld [vmem:[#allocation2 + $0x30] sm:$0xff]
        %v346 = vld [vmem:[#allocation2 + $0x38] sm:$0xff]
        %v347 = vld [vmem:[#allocation2 + $0x40] sm:$0xff]
        %v348 = vld [vmem:[#allocation2 + $0x48] sm:$0xff]
        %v349 = vld [vmem:[#allocation2 + $0x50] sm:$0xff]
        %v350 = vld [vmem:[#allocation2 + $0x58] sm:$0xff]
        %v351 = vld [vmem:[#allocation2 + $0x60] sm:$0xff]
        %v352 = vld [vmem:[#allocation2 + $0x68] sm:$0xff]
        %v353 = vld [vmem:[#allocation2 + $0x70] sm:$0xff]
        %v354 = vld [vmem:[#allocation2 + $0x78] sm:$0xff]
        %v355 = vld [vmem:[#allocation2 + $0x80] sm:$0xff]
        %v356 = vld [vmem:[#allocation2 + $0x88] sm:$0xff]
        %v357 = vld [vmem:[#allocation2 + $0x90] sm:$0xff]
        %v358 = vld [vmem:[#allocation2 + $0x98] sm:$0xff]
        %v359 = vld [vmem:[#allocation2 + $0xa0] sm:$0xff]
        %v360 = vld [vmem:[#allocation2 + $0xa8] sm:$0xff]
        %v361 = vld [vmem:[#allocation2 + $0xb0] sm:$0xff]
        %v362 = vld [vmem:[#allocation2 + $0xb8] sm:$0xff]
        %v363 = vld [vmem:[#allocation2 + $0xc0] sm:$0xff]
        %v364 = vld [vmem:[#allocation2 + $0xc8] sm:$0xff]
        %v365 = vld [vmem:[#allocation2 + $0xd0] sm:$0xff]
        %v366 = vld [vmem:[#allocation2 + $0xd8] sm:$0xff]
        %v367 = vld [vmem:[#allocation2 + $0xe0] sm:$0xff]
        %v368 = vld [vmem:[#allocation2 + $0xe8] sm:$0xff]
        %v369 = vld [vmem:[#allocation2 + $0xf0] sm:$0xff]
        %v370 = vld [vmem:[#allocation2 + $0xf8] sm:$0xff]
        %v371 = vld [vmem:[#allocation2 + $0x100] sm:$0xff]
        %v372 = vld [vmem:[#allocation2 + $0x108] sm:$0xff]
        %v373 = vld [vmem:[#allocation2 + $0x110] sm:$0xff]
        %v374 = vld [vmem:[#allocation2 + $0x118] sm:$0xff]
        %v375 = vld [vmem:[#allocation2 + $0x120] sm:$0xff]
        %v376 = vld [vmem:[#allocation2 + $0x128] sm:$0xff]
        %v377 = vld [vmem:[#allocation2 + $0x130] sm:$0xff]
        %v378 = vld [vmem:[#allocation2 + $0x138] sm:$0xff]
        %v379 = vld [vmem:[#allocation2 + $0x140] sm:$0xff]
        %v380 = vld [vmem:[#allocation2 + $0x148] sm:$0xff]
        %v381 = vld [vmem:[#allocation2 + $0x150] sm:$0xff]
        %v382 = vld [vmem:[#allocation2 + $0x158] sm:$0xff]
        %v383 = vld [vmem:[#allocation2 + $0x160] sm:$0xff]
        %v384 = vld [vmem:[#allocation2 + $0x168] sm:$0xff]
        %v385 = vld [vmem:[#allocation2 + $0x170] sm:$0xff]
        %v386 = vld [vmem:[#allocation2 + $0x178] sm:$0xff]
        %v387 = vld [vmem:[#allocation2 + $0x180] sm:$0xff]
        %v388 = vld [vmem:[#allocation2 + $0x188] sm:$0xff]
        %v389 = vld [vmem:[#allocation2 + $0x190] sm:$0xff]
        %v390 = vld [vmem:[#allocation2 + $0x198] sm:$0xff]
        %v391 = vld [vmem:[#allocation2 + $0x1a0] sm:$0xff]
        %v392 = vld [vmem:[#allocation2 + $0x1a8] sm:$0xff]
        %v393 = vld [vmem:[#allocation2 + $0x1b0] sm:$0xff]
        %v394 = vld [vmem:[#allocation2 + $0x1b8] sm:$0xff]
        %v395 = vld [vmem:[#allocation2 + $0x1c0] sm:$0xff]
        %v396 = vld [vmem:[#allocation2 + $0x1c8] sm:$0xff]
        %v397 = vld [vmem:[#allocation2 + $0x1d0] sm:$0xff]
        %v398 = vld [vmem:[#allocation2 + $0x1d8] sm:$0xff]
        %v399 = vld [vmem:[#allocation2 + $0x1e0] sm:$0xff]
        %v400 = vld [vmem:[#allocation2 + $0x1e8] sm:$0xff]
        %v401 = vld [vmem:[#allocation2 + $0x1f0] sm:$0xff]
        %v402 = vld [vmem:[#allocation2 + $0x1f8] sm:$0xff]
        %v403 = vld [vmem:[%s211] sm:$0xf]
        %v404 = vld [vmem:[%s211 + $0x4] sm:$0xf]
        %v405 = vld [vmem:[%s211 + $0x8] sm:$0xf]
        %v406 = vld [vmem:[%s211 + $0xc] sm:$0xf]
        %v407 = vld [vmem:[%s211 + $0x10] sm:$0xf]
        %v408 = vld [vmem:[%s211 + $0x14] sm:$0xf]
        %v409 = vld [vmem:[%s211 + $0x18] sm:$0xf]
        %v410 = vld [vmem:[%s211 + $0x1c] sm:$0xf]
        %v411 = vld [vmem:[%s211 + $0x20] sm:$0xf]
        %v412 = vld [vmem:[%s211 + $0x24] sm:$0xf]
        %v413 = vld [vmem:[%s211 + $0x28] sm:$0xf]
        %v414 = vld [vmem:[%s211 + $0x2c] sm:$0xf]
        %v415 = vld [vmem:[%s211 + $0x30] sm:$0xf]
        %v416 = vld [vmem:[%s211 + $0x34] sm:$0xf]
        %v417 = vld [vmem:[%s211 + $0x38] sm:$0xf]
        %v418 = vld [vmem:[%s211 + $0x3c] sm:$0xf]
        %v419 = vld [vmem:[%s211 + $0x40] sm:$0xf]
        %v420 = vld [vmem:[%s211 + $0x44] sm:$0xf]
        %v421 = vld [vmem:[%s211 + $0x48] sm:$0xf]
        %v422 = vld [vmem:[%s211 + $0x4c] sm:$0xf]
        %v423 = vld [vmem:[%s211 + $0x50] sm:$0xf]
        %v424 = vld [vmem:[%s211 + $0x54] sm:$0xf]
        %v425 = vld [vmem:[%s211 + $0x58] sm:$0xf]
        %v426 = vld [vmem:[%s211 + $0x5c] sm:$0xf]
        %v427 = vld [vmem:[%s211 + $0x60] sm:$0xf]
        %v428 = vld [vmem:[%s211 + $0x64] sm:$0xf]
        %v429 = vld [vmem:[%s211 + $0x68] sm:$0xf]
        %v430 = vld [vmem:[%s211 + $0x6c] sm:$0xf]
        %v431 = vld [vmem:[%s211 + $0x70] sm:$0xf]
        %v432 = vld [vmem:[%s211 + $0x74] sm:$0xf]
        %v433 = vld [vmem:[%s211 + $0x78] sm:$0xf]
        %v434 = vld [vmem:[%s211 + $0x7c] sm:$0xf]
        %v435 = vld [vmem:[%s211 + $0x80] sm:$0xf]
        %v436 = vld [vmem:[%s211 + $0x84] sm:$0xf]
        %v437 = vld [vmem:[%s211 + $0x88] sm:$0xf]
        %v438 = vld [vmem:[%s211 + $0x8c] sm:$0xf]
        %v439 = vld [vmem:[%s211 + $0x90] sm:$0xf]
        %v440 = vld [vmem:[%s211 + $0x94] sm:$0xf]
        %v441 = vld [vmem:[%s211 + $0x98] sm:$0xf]
        %v442 = vld [vmem:[%s211 + $0x9c] sm:$0xf]
        %v443 = vld [vmem:[%s211 + $0xa0] sm:$0xf]
        %v444 = vld [vmem:[%s211 + $0xa4] sm:$0xf]
        %v445 = vld [vmem:[%s211 + $0xa8] sm:$0xf]
        %v446 = vld [vmem:[%s211 + $0xac] sm:$0xf]
        %v447 = vld [vmem:[%s211 + $0xb0] sm:$0xf]
        %v448 = vld [vmem:[%s211 + $0xb4] sm:$0xf]
        %v449 = vld [vmem:[%s211 + $0xb8] sm:$0xf]
        %v450 = vld [vmem:[%s211 + $0xbc] sm:$0xf]
        %v451 = vld [vmem:[%s211 + $0xc0] sm:$0xf]
        %v452 = vld [vmem:[%s211 + $0xc4] sm:$0xf]
        %v453 = vld [vmem:[%s211 + $0xc8] sm:$0xf]
        %v454 = vld [vmem:[%s211 + $0xcc] sm:$0xf]
        %v455 = vld [vmem:[%s211 + $0xd0] sm:$0xf]
        %v456 = vld [vmem:[%s211 + $0xd4] sm:$0xf]
        %v457 = vld [vmem:[%s211 + $0xd8] sm:$0xf]
        %v458 = vld [vmem:[%s211 + $0xdc] sm:$0xf]
        %v459 = vld [vmem:[%s211 + $0xe0] sm:$0xf]
        %v460 = vld [vmem:[%s211 + $0xe4] sm:$0xf]
        %v461 = vld [vmem:[%s211 + $0xe8] sm:$0xf]
        %v462 = vld [vmem:[%s211 + $0xec] sm:$0xf]
        %v463 = vld [vmem:[%s211 + $0xf0] sm:$0xf]
        %v464 = vld [vmem:[%s211 + $0xf4] sm:$0xf]
        %v465 = vld [vmem:[%s211 + $0xf8] sm:$0xf]
        %v466 = vld [vmem:[%s211 + $0xfc] sm:$0xf]
        %v467 = vld [vmem:[%s256] sm:$0xf]
        %v468 = vld [vmem:[%s256 + $0x4] sm:$0xf]
        %v469 = vld [vmem:[%s256 + $0x8] sm:$0xf]
        %v470 = vld [vmem:[%s256 + $0xc] sm:$0x3]
        %v535 = vunpack.c.l.b16 %v403
        %v536 = vunpack.c.l.b16 %v404
        %v537 = vunpack.c.l.b16 %v405
        %v538 = vunpack.c.l.b16 %v406
        %v539 = vunpack.c.l.b16 %v407
        %v540 = vunpack.c.l.b16 %v408
        %v541 = vunpack.c.l.b16 %v409
        %v542 = vunpack.c.l.b16 %v410
        %v543 = vunpack.c.l.b16 %v411
        %v544 = vunpack.c.l.b16 %v412
        %v545 = vunpack.c.l.b16 %v413
        %v546 = vunpack.c.l.b16 %v414
        %v547 = vunpack.c.l.b16 %v415
        %v548 = vunpack.c.l.b16 %v416
        %v549 = vunpack.c.l.b16 %v417
        %v550 = vunpack.c.l.b16 %v418
        %v551 = vunpack.c.l.b16 %v419
        %v552 = vunpack.c.l.b16 %v420
        %v553 = vunpack.c.l.b16 %v421
        %v554 = vunpack.c.l.b16 %v422
        %v555 = vunpack.c.l.b16 %v423
        %v556 = vunpack.c.l.b16 %v424
        %v557 = vunpack.c.l.b16 %v425
        %v558 = vunpack.c.l.b16 %v426
        %v559 = vunpack.c.l.b16 %v427
        %v560 = vunpack.c.l.b16 %v428
        %v561 = vunpack.c.l.b16 %v429
        %v562 = vunpack.c.l.b16 %v430
        %v563 = vunpack.c.l.b16 %v431
        %v564 = vunpack.c.l.b16 %v432
        %v565 = vunpack.c.l.b16 %v433
        %v566 = vunpack.c.l.b16 %v434
        %v567 = vunpack.c.l.b16 %v435
        %v568 = vunpack.c.l.b16 %v436
        %v569 = vunpack.c.l.b16 %v437
        %v570 = vunpack.c.l.b16 %v438
        %v571 = vunpack.c.l.b16 %v439
        %v572 = vunpack.c.l.b16 %v440
        %v573 = vunpack.c.l.b16 %v441
        %v574 = vunpack.c.l.b16 %v442
        %v575 = vunpack.c.l.b16 %v443
        %v576 = vunpack.c.l.b16 %v444
        %v577 = vunpack.c.l.b16 %v445
        %v578 = vunpack.c.l.b16 %v446
        %v579 = vunpack.c.l.b16 %v447
        %v580 = vunpack.c.l.b16 %v448
        %v581 = vunpack.c.l.b16 %v449
        %v582 = vunpack.c.l.b16 %v450
        %v583 = vunpack.c.l.b16 %v451
        %v584 = vunpack.c.l.b16 %v452
        %v585 = vunpack.c.l.b16 %v453
        %v586 = vunpack.c.l.b16 %v454
        %v587 = vunpack.c.l.b16 %v455
        %v588 = vunpack.c.l.b16 %v456
        %v589 = vunpack.c.l.b16 %v457
        %v590 = vunpack.c.l.b16 %v458
        %v591 = vunpack.c.l.b16 %v459
        %v592 = vunpack.c.l.b16 %v460
        %v593 = vunpack.c.l.b16 %v461
        %v594 = vunpack.c.l.b16 %v462
        %v595 = vunpack.c.l.b16 %v463
        %v596 = vunpack.c.l.b16 %v464
        %v597 = vunpack.c.l.b16 %v465
        %v598 = vunpack.c.l.b16 %v466
        %v599 = vpack.c.b16 %v536, %v535
        %v600 = vpack.c.b16 %v538, %v537
        %v601 = vpack.c.b16 %v540, %v539
        %v602 = vpack.c.b16 %v542, %v541
        %v603 = vpack.c.b16 %v544, %v543
        %v604 = vpack.c.b16 %v546, %v545
        %v605 = vpack.c.b16 %v548, %v547
        %v606 = vpack.c.b16 %v550, %v549
        %v607 = vpack.c.b16 %v552, %v551
        %v608 = vpack.c.b16 %v554, %v553
        %v609 = vpack.c.b16 %v556, %v555
        %v610 = vpack.c.b16 %v558, %v557
        %v611 = vpack.c.b16 %v560, %v559
        %v612 = vpack.c.b16 %v562, %v561
        %v613 = vpack.c.b16 %v564, %v563
        %v614 = vpack.c.b16 %v566, %v565
        %v615 = vpack.c.b16 %v568, %v567
        %v616 = vpack.c.b16 %v570, %v569
        %v617 = vpack.c.b16 %v572, %v571
        %v618 = vpack.c.b16 %v574, %v573
        %v619 = vpack.c.b16 %v576, %v575
        %v620 = vpack.c.b16 %v578, %v577
        %v621 = vpack.c.b16 %v580, %v579
        %v622 = vpack.c.b16 %v582, %v581
        %v623 = vpack.c.b16 %v584, %v583
        %v624 = vpack.c.b16 %v586, %v585
        %v625 = vpack.c.b16 %v588, %v587
        %v626 = vpack.c.b16 %v590, %v589
        %v627 = vpack.c.b16 %v592, %v591
        %v628 = vpack.c.b16 %v594, %v593
        %v629 = vpack.c.b16 %v596, %v595
        %v630 = vpack.c.b16 %v598, %v597
        %v635 = vunpack.c.l.b16 %v467
        %v636 = vunpack.c.l.b16 %v468
        %v637 = vunpack.c.l.b16 %v469
        %v638 = vunpack.c.l.b16 %v470
        %v639 = vpack.c.b16 %v636, %v635
        %v640 = vpack.c.b16 %v638, %v637
        %vm642 = vcmask 220160
        %v644 = vsel %vm642, %v599, 0
        %v647 = vsel %vm642, %v600, 0
        %v650 = vsel %vm642, %v601, 0
        %v653 = vsel %vm642, %v602, 0
        %v656 = vsel %vm642, %v603, 0
        %v659 = vsel %vm642, %v604, 0
        %v662 = vsel %vm642, %v605, 0
        %v665 = vsel %vm642, %v606, 0
        %v668 = vsel %vm642, %v607, 0
        %v671 = vsel %vm642, %v608, 0
        %v674 = vsel %vm642, %v609, 0
        %v677 = vsel %vm642, %v610, 0
        %v680 = vsel %vm642, %v611, 0
        %v683 = vsel %vm642, %v612, 0
        %v686 = vsel %vm642, %v613, 0
        %v689 = vsel %vm642, %v614, 0
        %v692 = vsel %vm642, %v615, 0
        %v695 = vsel %vm642, %v616, 0
        %v698 = vsel %vm642, %v617, 0
        %v701 = vsel %vm642, %v618, 0
        %v704 = vsel %vm642, %v619, 0
        %v707 = vsel %vm642, %v620, 0
        %v710 = vsel %vm642, %v621, 0
        %v713 = vsel %vm642, %v622, 0
        %v716 = vsel %vm642, %v623, 0
        %v719 = vsel %vm642, %v624, 0
        %v722 = vsel %vm642, %v625, 0
        %v725 = vsel %vm642, %v626, 0
        %v728 = vsel %vm642, %v627, 0
        %v731 = vsel %vm642, %v628, 0
        %v734 = vsel %vm642, %v629, 0
        %v737 = vsel %vm642, %v630, 0
        %vm739 = vcmask 1044480
        %vm740 = vcmask 1045504
        %v741 = vsel %vm739, 4294967295, 65535
        %v742 = vsel %vm740, %v741, 0
        %v744 = vand.u32 %v640, %v742
        %746 = vmatprep.subr.bf16.mxu0 0
        %747 = vmatpush1.bf16.msra.mxu0 %v639
        %748 = vmatprep.subr.bf16.mxu0 0
        %749 = vmatpush1.bf16.msra.mxu0 %v744
        %750 = vmatprep.subr.bf16.mxu0 0
        %751 = vmatpush1.bf16.msra.mxu0 0
        %752 = vmatprep.subr.bf16.mxu0 0
        %753 = vmatpush1.bf16.msra.mxu0 0
        %754 = vmatprep.subr.bf16.mxu0 0
        %755 = vmatpush1.bf16.msra.mxu0 0
        %756 = vmatprep.subr.bf16.mxu0 0
        %757 = vmatpush1.bf16.msra.mxu0 0
        %758 = vmatprep.subr.bf16.mxu0 0
        %759 = vmatpush1.bf16.msra.mxu0 0
        %760 = vmatprep.subr.bf16.mxu0 0
        %761 = vmatpush1.bf16.msra.mxu0 0
        %762 = vmatprep.subr.bf16.mxu0 0
        %763 = vmatpush1.bf16.msra.mxu0 0
        %764 = vmatprep.subr.bf16.mxu0 0
        %765 = vmatpush1.bf16.msra.mxu0 0
        %766 = vmatprep.subr.bf16.mxu0 0
        %767 = vmatpush1.bf16.msra.mxu0 0
        %768 = vmatprep.subr.bf16.mxu0 0
        %769 = vmatpush1.bf16.msra.mxu0 0
        %770 = vmatprep.subr.bf16.mxu0 0
        %771 = vmatpush1.bf16.msra.mxu0 0
        %772 = vmatprep.subr.bf16.mxu0 0
        %773 = vmatpush1.bf16.msra.mxu0 0
        %774 = vmatprep.subr.bf16.mxu0 0
        %775 = vmatpush1.bf16.msra.mxu0 0
        %776 = vmatprep.subr.bf16.mxu0 0
        %777 = vmatpush1.bf16.msra.mxu0 0
        %778 = vmatprep.mubr.bf16.mxu0 0
        %779 = vmatmul.mubr.bf16.gmra.mrb[0].mxu0 %v644
        %v780 = vpop.f32.mrb[0].mxu0
        %v781 = vadd.f32 0.0, %v780
        %v782 = vpop.f32.mrb[0].mxu0
        %v783 = vpop.f32.mrb[0].mxu0
        %v784 = vadd.f32 0.0, %v783
        %v785 = vpop.f32.mrb[0].mxu0
        %786 = vmatprep.mubr.bf16.mxu0 0
        %787 = vmatmul.mubr.bf16.gmra.mrb[0].mxu0 %v647
        %v788 = vpop.f32.mrb[0].mxu0
        %v789 = vadd.f32 0.0, %v788
        %v790 = vpop.f32.mrb[0].mxu0
        %v791 = vpop.f32.mrb[0].mxu0
        %v792 = vadd.f32 0.0, %v791
        %v793 = vpop.f32.mrb[0].mxu0
        %794 = vmatprep.mubr.bf16.mxu0 0
        %795 = vmatmul.mubr.bf16.gmra.mrb[0].mxu0 %v650
        %v796 = vpop.f32.mrb[0].mxu0
        %v797 = vadd.f32 0.0, %v796
        %v798 = vpop.f32.mrb[0].mxu0
        %v799 = vpop.f32.mrb[0].mxu0
        %v800 = vadd.f32 0.0, %v799
        %v801 = vpop.f32.mrb[0].mxu0
        %802 = vmatprep.mubr.bf16.mxu0 0
        %803 = vmatmul.mubr.bf16.gmra.mrb[0].mxu0 %v653
        %v804 = vpop.f32.mrb[0].mxu0
        %v805 = vadd.f32 0.0, %v804
        %v806 = vpop.f32.mrb[0].mxu0
        %v807 = vpop.f32.mrb[0].mxu0
        %v808 = vadd.f32 0.0, %v807
        %v809 = vpop.f32.mrb[0].mxu0
        %810 = vmatprep.mubr.bf16.mxu0 0
        %811 = vmatmul.mubr.bf16.gmra.mrb[0].mxu0 %v656
        %v812 = vpop.f32.mrb[0].mxu0
        %v813 = vadd.f32 0.0, %v812
        %v814 = vpop.f32.mrb[0].mxu0
        %v815 = vpop.f32.mrb[0].mxu0
        %v816 = vadd.f32 0.0, %v815
        %v817 = vpop.f32.mrb[0].mxu0
        %818 = vmatprep.mubr.bf16.mxu0 0
        %819 = vmatmul.mubr.bf16.gmra.mrb[0].mxu0 %v659
        %v820 = vpop.f32.mrb[0].mxu0
        %v821 = vadd.f32 0.0, %v820
        %v822 = vpop.f32.mrb[0].mxu0
        %v823 = vpop.f32.mrb[0].mxu0
        %v824 = vadd.f32 0.0, %v823
        %v825 = vpop.f32.mrb[0].mxu0
        %826 = vmatprep.mubr.bf16.mxu0 0
        %827 = vmatmul.mubr.bf16.gmra.mrb[0].mxu0 %v662
        %v828 = vpop.f32.mrb[0].mxu0
        %v829 = vadd.f32 0.0, %v828
        %v830 = vpop.f32.mrb[0].mxu0
        %v831 = vpop.f32.mrb[0].mxu0
        %v832 = vadd.f32 0.0, %v831
        %v833 = vpop.f32.mrb[0].mxu0
        %834 = vmatprep.mubr.bf16.mxu0 0
        %835 = vmatmul.mubr.bf16.gmra.mrb[0].mxu0 %v665
        %v836 = vpop.f32.mrb[0].mxu0
        %v837 = vadd.f32 0.0, %v836
        %v838 = vpop.f32.mrb[0].mxu0
        %v839 = vpop.f32.mrb[0].mxu0
        %v840 = vadd.f32 0.0, %v839
        %v841 = vpop.f32.mrb[0].mxu0
        %842 = vmatprep.mubr.bf16.mxu0 0
        %843 = vmatmul.mubr.bf16.gmra.mrb[0].mxu0 %v668
        %v844 = vpop.f32.mrb[0].mxu0
        %v845 = vadd.f32 0.0, %v844
        %v846 = vpop.f32.mrb[0].mxu0
        %v847 = vpop.f32.mrb[0].mxu0
        %v848 = vadd.f32 0.0, %v847
        %v849 = vpop.f32.mrb[0].mxu0
        %850 = vmatprep.mubr.bf16.mxu0 0
        %851 = vmatmul.mubr.bf16.gmra.mrb[0].mxu0 %v671
        %v852 = vpop.f32.mrb[0].mxu0
        %v853 = vadd.f32 0.0, %v852
        %v854 = vpop.f32.mrb[0].mxu0
        %v855 = vpop.f32.mrb[0].mxu0
        %v856 = vadd.f32 0.0, %v855
        %v857 = vpop.f32.mrb[0].mxu0
        %858 = vmatprep.mubr.bf16.mxu0 0
        %859 = vmatmul.mubr.bf16.gmra.mrb[0].mxu0 %v674
        %v860 = vpop.f32.mrb[0].mxu0
        %v861 = vadd.f32 0.0, %v860
        %v862 = vpop.f32.mrb[0].mxu0
        %v863 = vpop.f32.mrb[0].mxu0
        %v864 = vadd.f32 0.0, %v863
        %v865 = vpop.f32.mrb[0].mxu0
        %866 = vmatprep.mubr.bf16.mxu0 0
        %867 = vmatmul.mubr.bf16.gmra.mrb[0].mxu0 %v677
        %v868 = vpop.f32.mrb[0].mxu0
        %v869 = vadd.f32 0.0, %v868
        %v870 = vpop.f32.mrb[0].mxu0
        %v871 = vpop.f32.mrb[0].mxu0
        %v872 = vadd.f32 0.0, %v871
        %v873 = vpop.f32.mrb[0].mxu0
        %874 = vmatprep.mubr.bf16.mxu0 0
        %875 = vmatmul.mubr.bf16.gmra.mrb[0].mxu0 %v680
        %v876 = vpop.f32.mrb[0].mxu0
        %v877 = vadd.f32 0.0, %v876
        %v878 = vpop.f32.mrb[0].mxu0
        %v879 = vpop.f32.mrb[0].mxu0
        %v880 = vadd.f32 0.0, %v879
        %v881 = vpop.f32.mrb[0].mxu0
        %882 = vmatprep.mubr.bf16.mxu0 0
        %883 = vmatmul.mubr.bf16.gmra.mrb[0].mxu0 %v683
        %v884 = vpop.f32.mrb[0].mxu0
        %v885 = vadd.f32 0.0, %v884
        %v886 = vpop.f32.mrb[0].mxu0
        %v887 = vpop.f32.mrb[0].mxu0
        %v888 = vadd.f32 0.0, %v887
        %v889 = vpop.f32.mrb[0].mxu0
        %890 = vmatprep.mubr.bf16.mxu0 0
        %891 = vmatmul.mubr.bf16.gmra.mrb[0].mxu0 %v686
        %v892 = vpop.f32.mrb[0].mxu0
        %v893 = vadd.f32 0.0, %v892
        %v894 = vpop.f32.mrb[0].mxu0
        %v895 = vpop.f32.mrb[0].mxu0
        %v896 = vadd.f32 0.0, %v895
        %v897 = vpop.f32.mrb[0].mxu0
        %898 = vmatprep.mubr.bf16.mxu0 0
        %899 = vmatmul.mubr.bf16.gmra.mrb[0].mxu0 %v689
        %v900 = vpop.f32.mrb[0].mxu0
        %v901 = vadd.f32 0.0, %v900
        %v902 = vpop.f32.mrb[0].mxu0
        %v903 = vpop.f32.mrb[0].mxu0
        %v904 = vadd.f32 0.0, %v903
        %v905 = vpop.f32.mrb[0].mxu0
        %906 = vmatprep.mubr.bf16.mxu0 0
        %907 = vmatmul.mubr.bf16.gmra.mrb[0].mxu0 %v692
        %v908 = vpop.f32.mrb[0].mxu0
        %v909 = vadd.f32 0.0, %v908
        %v910 = vpop.f32.mrb[0].mxu0
        %v911 = vpop.f32.mrb[0].mxu0
        %v912 = vadd.f32 0.0, %v911
        %v913 = vpop.f32.mrb[0].mxu0
        %914 = vmatprep.mubr.bf16.mxu0 0
        %915 = vmatmul.mubr.bf16.gmra.mrb[0].mxu0 %v695
        %v916 = vpop.f32.mrb[0].mxu0
        %v917 = vadd.f32 0.0, %v916
        %v918 = vpop.f32.mrb[0].mxu0
        %v919 = vpop.f32.mrb[0].mxu0
        %v920 = vadd.f32 0.0, %v919
        %v921 = vpop.f32.mrb[0].mxu0
        %922 = vmatprep.mubr.bf16.mxu0 0
        %923 = vmatmul.mubr.bf16.gmra.mrb[0].mxu0 %v698
        %v924 = vpop.f32.mrb[0].mxu0
        %v925 = vadd.f32 0.0, %v924
        %v926 = vpop.f32.mrb[0].mxu0
        %v927 = vpop.f32.mrb[0].mxu0
        %v928 = vadd.f32 0.0, %v927
        %v929 = vpop.f32.mrb[0].mxu0
        %930 = vmatprep.mubr.bf16.mxu0 0
        %931 = vmatmul.mubr.bf16.gmra.mrb[0].mxu0 %v701
        %v932 = vpop.f32.mrb[0].mxu0
        %v933 = vadd.f32 0.0, %v932
        %v934 = vpop.f32.mrb[0].mxu0
        %v935 = vpop.f32.mrb[0].mxu0
        %v936 = vadd.f32 0.0, %v935
        %v937 = vpop.f32.mrb[0].mxu0
        %938 = vmatprep.mubr.bf16.mxu0 0
        %939 = vmatmul.mubr.bf16.gmra.mrb[0].mxu0 %v704
        %v940 = vpop.f32.mrb[0].mxu0
        %v941 = vadd.f32 0.0, %v940
        %v942 = vpop.f32.mrb[0].mxu0
        %v943 = vpop.f32.mrb[0].mxu0
        %v944 = vadd.f32 0.0, %v943
        %v945 = vpop.f32.mrb[0].mxu0
        %946 = vmatprep.mubr.bf16.mxu0 0
        %947 = vmatmul.mubr.bf16.gmra.mrb[0].mxu0 %v707
        %v948 = vpop.f32.mrb[0].mxu0
        %v949 = vadd.f32 0.0, %v948
        %v950 = vpop.f32.mrb[0].mxu0
        %v951 = vpop.f32.mrb[0].mxu0
        %v952 = vadd.f32 0.0, %v951
        %v953 = vpop.f32.mrb[0].mxu0
        %954 = vmatprep.mubr.bf16.mxu0 0
        %955 = vmatmul.mubr.bf16.gmra.mrb[0].mxu0 %v710
        %v956 = vpop.f32.mrb[0].mxu0
        %v957 = vadd.f32 0.0, %v956
        %v958 = vpop.f32.mrb[0].mxu0
        %v959 = vpop.f32.mrb[0].mxu0
        %v960 = vadd.f32 0.0, %v959
        %v961 = vpop.f32.mrb[0].mxu0
        %962 = vmatprep.mubr.bf16.mxu0 0
        %963 = vmatmul.mubr.bf16.gmra.mrb[0].mxu0 %v713
        %v964 = vpop.f32.mrb[0].mxu0
        %v965 = vadd.f32 0.0, %v964
        %v966 = vpop.f32.mrb[0].mxu0
        %v967 = vpop.f32.mrb[0].mxu0
        %v968 = vadd.f32 0.0, %v967
        %v969 = vpop.f32.mrb[0].mxu0
        %970 = vmatprep.mubr.bf16.mxu0 0
        %971 = vmatmul.mubr.bf16.gmra.mrb[0].mxu0 %v716
        %v972 = vpop.f32.mrb[0].mxu0
        %v973 = vadd.f32 0.0, %v972
        %v974 = vpop.f32.mrb[0].mxu0
        %v975 = vpop.f32.mrb[0].mxu0
        %v976 = vadd.f32 0.0, %v975
        %v977 = vpop.f32.mrb[0].mxu0
        %978 = vmatprep.mubr.bf16.mxu0 0
        %979 = vmatmul.mubr.bf16.gmra.mrb[0].mxu0 %v719
        %v980 = vpop.f32.mrb[0].mxu0
        %v981 = vadd.f32 0.0, %v980
        %v982 = vpop.f32.mrb[0].mxu0
        %v983 = vpop.f32.mrb[0].mxu0
        %v984 = vadd.f32 0.0, %v983
        %v985 = vpop.f32.mrb[0].mxu0
        %986 = vmatprep.mubr.bf16.mxu0 0
        %987 = vmatmul.mubr.bf16.gmra.mrb[0].mxu0 %v722
        %v988 = vpop.f32.mrb[0].mxu0
        %v989 = vadd.f32 0.0, %v988
        %v990 = vpop.f32.mrb[0].mxu0
        %v991 = vpop.f32.mrb[0].mxu0
        %v992 = vadd.f32 0.0, %v991
        %v993 = vpop.f32.mrb[0].mxu0
        %994 = vmatprep.mubr.bf16.mxu0 0
        %995 = vmatmul.mubr.bf16.gmra.mrb[0].mxu0 %v725
        %v996 = vpop.f32.mrb[0].mxu0
        %v997 = vadd.f32 0.0, %v996
        %v998 = vpop.f32.mrb[0].mxu0
        %v999 = vpop.f32.mrb[0].mxu0
        %v1000 = vadd.f32 0.0, %v999
        %v1001 = vpop.f32.mrb[0].mxu0
        %1002 = vmatprep.mubr.bf16.mxu0 0
        %1003 = vmatmul.mubr.bf16.gmra.mrb[0].mxu0 %v728
        %v1004 = vpop.f32.mrb[0].mxu0
        %v1005 = vadd.f32 0.0, %v1004
        %v1006 = vpop.f32.mrb[0].mxu0
        %v1007 = vpop.f32.mrb[0].mxu0
        %v1008 = vadd.f32 0.0, %v1007
        %v1009 = vpop.f32.mrb[0].mxu0
        %1010 = vmatprep.mubr.bf16.mxu0 0
        %1011 = vmatmul.mubr.bf16.gmra.mrb[0].mxu0 %v731
        %v1012 = vpop.f32.mrb[0].mxu0
        %v1013 = vadd.f32 0.0, %v1012
        %v1014 = vpop.f32.mrb[0].mxu0
        %v1015 = vpop.f32.mrb[0].mxu0
        %v1016 = vadd.f32 0.0, %v1015
        %v1017 = vpop.f32.mrb[0].mxu0
        %1018 = vmatprep.mubr.bf16.mxu0 0
        %1019 = vmatmul.mubr.bf16.gmra.mrb[0].mxu0 %v734
        %v1020 = vpop.f32.mrb[0].mxu0
        %v1021 = vadd.f32 0.0, %v1020
        %v1022 = vpop.f32.mrb[0].mxu0
        %v1023 = vpop.f32.mrb[0].mxu0
        %v1024 = vadd.f32 0.0, %v1023
        %v1025 = vpop.f32.mrb[0].mxu0
        %1026 = vmatprep.mubr.bf16.mxu0 0
        %1027 = vmatmul.mubr.bf16.gmra.mrb[0].mxu0 %v737
        %v1028 = vpop.f32.mrb[0].mxu0
        %v1029 = vadd.f32 0.0, %v1028
        %v1030 = vpop.f32.mrb[0].mxu0
        %v1031 = vpop.f32.mrb[0].mxu0
        %v1032 = vadd.f32 0.0, %v1031
        %v1033 = vpop.f32.mrb[0].mxu0
        %1034 = vdwg.mxu0
        %v1035 = vadd.f32 %v339, %v781
        %v1036 = vadd.f32 %v340, %v784
        %v1037 = vadd.f32 %v341, %v789
        %v1038 = vadd.f32 %v342, %v792
        %v1039 = vadd.f32 %v343, %v797
        %v1040 = vadd.f32 %v344, %v800
        %v1041 = vadd.f32 %v345, %v805
        %v1042 = vadd.f32 %v346, %v808
        %v1043 = vadd.f32 %v347, %v813
        %v1044 = vadd.f32 %v348, %v816
        %v1045 = vadd.f32 %v349, %v821
        %v1046 = vadd.f32 %v350, %v824
        %v1047 = vadd.f32 %v351, %v829
        %v1048 = vadd.f32 %v352, %v832
        %v1049 = vadd.f32 %v353, %v837
        %v1050 = vadd.f32 %v354, %v840
        %v1051 = vadd.f32 %v355, %v845
        %v1052 = vadd.f32 %v356, %v848
        %v1053 = vadd.f32 %v357, %v853
        %v1054 = vadd.f32 %v358, %v856
        %v1055 = vadd.f32 %v359, %v861
        %v1056 = vadd.f32 %v360, %v864
        %v1057 = vadd.f32 %v361, %v869
        %v1058 = vadd.f32 %v362, %v872
        %v1059 = vadd.f32 %v363, %v877
        %v1060 = vadd.f32 %v364, %v880
        %v1061 = vadd.f32 %v365, %v885
        %v1062 = vadd.f32 %v366, %v888
        %v1063 = vadd.f32 %v367, %v893
        %v1064 = vadd.f32 %v368, %v896
        %v1065 = vadd.f32 %v369, %v901
        %v1066 = vadd.f32 %v370, %v904
        %v1067 = vadd.f32 %v371, %v909
        %v1068 = vadd.f32 %v372, %v912
        %v1069 = vadd.f32 %v373, %v917
        %v1070 = vadd.f32 %v374, %v920
        %v1071 = vadd.f32 %v375, %v925
        %v1072 = vadd.f32 %v376, %v928
        %v1073 = vadd.f32 %v377, %v933
        %v1074 = vadd.f32 %v378, %v936
        %v1075 = vadd.f32 %v379, %v941
        %v1076 = vadd.f32 %v380, %v944
        %v1077 = vadd.f32 %v381, %v949
        %v1078 = vadd.f32 %v382, %v952
        %v1079 = vadd.f32 %v383, %v957
        %v1080 = vadd.f32 %v384, %v960
        %v1081 = vadd.f32 %v385, %v965
        %v1082 = vadd.f32 %v386, %v968
        %v1083 = vadd.f32 %v387, %v973
        %v1084 = vadd.f32 %v388, %v976
        %v1085 = vadd.f32 %v389, %v981
        %v1086 = vadd.f32 %v390, %v984
        %v1087 = vadd.f32 %v391, %v989
        %v1088 = vadd.f32 %v392, %v992
        %v1089 = vadd.f32 %v393, %v997
        %v1090 = vadd.f32 %v394, %v1000
        %v1091 = vadd.f32 %v395, %v1005
        %v1092 = vadd.f32 %v396, %v1008
        %v1093 = vadd.f32 %v397, %v1013
        %v1094 = vadd.f32 %v398, %v1016
        %v1095 = vadd.f32 %v399, %v1021
        %v1096 = vadd.f32 %v400, %v1024
        %v1097 = vadd.f32 %v401, %v1029
        %v1098 = vadd.f32 %v402, %v1032
        %1099 = vst [vmem:[#allocation2] sm:$0xff] %v1035
        %1100 = vst [vmem:[#allocation2 + $0x8] sm:$0xff] %v1036
        %1101 = vst [vmem:[#allocation2 + $0x10] sm:$0xff] %v1037
        %1102 = vst [vmem:[#allocation2 + $0x18] sm:$0xff] %v1038
        %1103 = vst [vmem:[#allocation2 + $0x20] sm:$0xff] %v1039
        %1104 = vst [vmem:[#allocation2 + $0x28] sm:$0xff] %v1040
        %1105 = vst [vmem:[#allocation2 + $0x30] sm:$0xff] %v1041
        %1106 = vst [vmem:[#allocation2 + $0x38] sm:$0xff] %v1042
        %1107 = vst [vmem:[#allocation2 + $0x40] sm:$0xff] %v1043
        %1108 = vst [vmem:[#allocation2 + $0x48] sm:$0xff] %v1044
        %1109 = vst [vmem:[#allocation2 + $0x50] sm:$0xff] %v1045
        %1110 = vst [vmem:[#allocation2 + $0x58] sm:$0xff] %v1046
        %1111 = vst [vmem:[#allocation2 + $0x60] sm:$0xff] %v1047
        %1112 = vst [vmem:[#allocation2 + $0x68] sm:$0xff] %v1048
        %1113 = vst [vmem:[#allocation2 + $0x70] sm:$0xff] %v1049
        %1114 = vst [vmem:[#allocation2 + $0x78] sm:$0xff] %v1050
        %1115 = vst [vmem:[#allocation2 + $0x80] sm:$0xff] %v1051
        %1116 = vst [vmem:[#allocation2 + $0x88] sm:$0xff] %v1052
        %1117 = vst [vmem:[#allocation2 + $0x90] sm:$0xff] %v1053
        %1118 = vst [vmem:[#allocation2 + $0x98] sm:$0xff] %v1054
        %1119 = vst [vmem:[#allocation2 + $0xa0] sm:$0xff] %v1055
        %1120 = vst [vmem:[#allocation2 + $0xa8] sm:$0xff] %v1056
        %1121 = vst [vmem:[#allocation2 + $0xb0] sm:$0xff] %v1057
        %1122 = vst [vmem:[#allocation2 + $0xb8] sm:$0xff] %v1058
        %1123 = vst [vmem:[#allocation2 + $0xc0] sm:$0xff] %v1059
        %1124 = vst [vmem:[#allocation2 + $0xc8] sm:$0xff] %v1060
        %1125 = vst [vmem:[#allocation2 + $0xd0] sm:$0xff] %v1061
        %1126 = vst [vmem:[#allocation2 + $0xd8] sm:$0xff] %v1062
        %1127 = vst [vmem:[#allocation2 + $0xe0] sm:$0xff] %v1063
        %1128 = vst [vmem:[#allocation2 + $0xe8] sm:$0xff] %v1064
        %1129 = vst [vmem:[#allocation2 + $0xf0] sm:$0xff] %v1065
        %1130 = vst [vmem:[#allocation2 + $0xf8] sm:$0xff] %v1066
        %1131 = vst [vmem:[#allocation2 + $0x100] sm:$0xff] %v1067
        %1132 = vst [vmem:[#allocation2 + $0x108] sm:$0xff] %v1068
        %1133 = vst [vmem:[#allocation2 + $0x110] sm:$0xff] %v1069
        %1134 = vst [vmem:[#allocation2 + $0x118] sm:$0xff] %v1070
        %1135 = vst [vmem:[#allocation2 + $0x120] sm:$0xff] %v1071
        %1136 = vst [vmem:[#allocation2 + $0x128] sm:$0xff] %v1072
        %1137 = vst [vmem:[#allocation2 + $0x130] sm:$0xff] %v1073
        %1138 = vst [vmem:[#allocation2 + $0x138] sm:$0xff] %v1074
        %1139 = vst [vmem:[#allocation2 + $0x140] sm:$0xff] %v1075
        %1140 = vst [vmem:[#allocation2 + $0x148] sm:$0xff] %v1076
        %1141 = vst [vmem:[#allocation2 + $0x150] sm:$0xff] %v1077
        %1142 = vst [vmem:[#allocation2 + $0x158] sm:$0xff] %v1078
        %1143 = vst [vmem:[#allocation2 + $0x160] sm:$0xff] %v1079
        %1144 = vst [vmem:[#allocation2 + $0x168] sm:$0xff] %v1080
        %1145 = vst [vmem:[#allocation2 + $0x170] sm:$0xff] %v1081
        %1146 = vst [vmem:[#allocation2 + $0x178] sm:$0xff] %v1082
        %1147 = vst [vmem:[#allocation2 + $0x180] sm:$0xff] %v1083
        %1148 = vst [vmem:[#allocation2 + $0x188] sm:$0xff] %v1084
        %1149 = vst [vmem:[#allocation2 + $0x190] sm:$0xff] %v1085
        %1150 = vst [vmem:[#allocation2 + $0x198] sm:$0xff] %v1086
        %1151 = vst [vmem:[#allocation2 + $0x1a0] sm:$0xff] %v1087
        %1152 = vst [vmem:[#allocation2 + $0x1a8] sm:$0xff] %v1088
        %1153 = vst [vmem:[#allocation2 + $0x1b0] sm:$0xff] %v1089
        %1154 = vst [vmem:[#allocation2 + $0x1b8] sm:$0xff] %v1090
        %1155 = vst [vmem:[#allocation2 + $0x1c0] sm:$0xff] %v1091
        %1156 = vst [vmem:[#allocation2 + $0x1c8] sm:$0xff] %v1092
        %1157 = vst [vmem:[#allocation2 + $0x1d0] sm:$0xff] %v1093
        %1158 = vst [vmem:[#allocation2 + $0x1d8] sm:$0xff] %v1094
        %1159 = vst [vmem:[#allocation2 + $0x1e0] sm:$0xff] %v1095
        %1160 = vst [vmem:[#allocation2 + $0x1e8] sm:$0xff] %v1096
        %1161 = vst [vmem:[#allocation2 + $0x1f0] sm:$0xff] %v1097
        %1162 = vst [vmem:[#allocation2 + $0x1f8] sm:$0xff] %v1098
        // Predicated region
        $region41: #{matmul_bias_act.1} parent=31 // pred_check
          %p1163 = pneg %p271
        $region42: #{matmul_bias_act.1} parent=31 // pred_check_branch
          %1165 = sbr.rel (%p1163) target = $region44
        $region43: #{matmul_bias_act.1} parent=31 // pred_region
          %v1166 = vld [vmem:[#allocation2] sm:$0xff]
          %v1167 = vld [vmem:[#allocation2 + $0x8] sm:$0xff]
          %v1168 = vld [vmem:[#allocation2 + $0x10] sm:$0xff]
          %v1169 = vld [vmem:[#allocation2 + $0x18] sm:$0xff]
          %v1170 = vld [vmem:[#allocation2 + $0x20] sm:$0xff]
          %v1171 = vld [vmem:[#allocation2 + $0x28] sm:$0xff]
          %v1172 = vld [vmem:[#allocation2 + $0x30] sm:$0xff]
          %v1173 = vld [vmem:[#allocation2 + $0x38] sm:$0xff]
          %v1174 = vld [vmem:[#allocation2 + $0x40] sm:$0xff]
          %v1175 = vld [vmem:[#allocation2 + $0x48] sm:$0xff]
          %v1176 = vld [vmem:[#allocation2 + $0x50] sm:$0xff]
          %v1177 = vld [vmem:[#allocation2 + $0x58] sm:$0xff]
          %v1178 = vld [vmem:[#allocation2 + $0x60] sm:$0xff]
          %v1179 = vld [vmem:[#allocation2 + $0x68] sm:$0xff]
          %v1180 = vld [vmem:[#allocation2 + $0x70] sm:$0xff]
          %v1181 = vld [vmem:[#allocation2 + $0x78] sm:$0xff]
          %v1182 = vld [vmem:[#allocation2 + $0x80] sm:$0xff]
          %v1183 = vld [vmem:[#allocation2 + $0x88] sm:$0xff]
          %v1184 = vld [vmem:[#allocation2 + $0x90] sm:$0xff]
          %v1185 = vld [vmem:[#allocation2 + $0x98] sm:$0xff]
          %v1186 = vld [vmem:[#allocation2 + $0xa0] sm:$0xff]
          %v1187 = vld [vmem:[#allocation2 + $0xa8] sm:$0xff]
          %v1188 = vld [vmem:[#allocation2 + $0xb0] sm:$0xff]
          %v1189 = vld [vmem:[#allocation2 + $0xb8] sm:$0xff]
          %v1190 = vld [vmem:[#allocation2 + $0xc0] sm:$0xff]
          %v1191 = vld [vmem:[#allocation2 + $0xc8] sm:$0xff]
          %v1192 = vld [vmem:[#allocation2 + $0xd0] sm:$0xff]
          %v1193 = vld [vmem:[#allocation2 + $0xd8] sm:$0xff]
          %v1194 = vld [vmem:[#allocation2 + $0xe0] sm:$0xff]
          %v1195 = vld [vmem:[#allocation2 + $0xe8] sm:$0xff]
          %v1196 = vld [vmem:[#allocation2 + $0xf0] sm:$0xff]
          %v1197 = vld [vmem:[#allocation2 + $0xf8] sm:$0xff]
          %v1198 = vld [vmem:[#allocation2 + $0x100] sm:$0xff]
          %v1199 = vld [vmem:[#allocation2 + $0x108] sm:$0xff]
          %v1200 = vld [vmem:[#allocation2 + $0x110] sm:$0xff]
          %v1201 = vld [vmem:[#allocation2 + $0x118] sm:$0xff]
          %v1202 = vld [vmem:[#allocation2 + $0x120] sm:$0xff]
          %v1203 = vld [vmem:[#allocation2 + $0x128] sm:$0xff]
          %v1204 = vld [vmem:[#allocation2 + $0x130] sm:$0xff]
          %v1205 = vld [vmem:[#allocation2 + $0x138] sm:$0xff]
          %v1206 = vld [vmem:[#allocation2 + $0x140] sm:$0xff]
          %v1207 = vld [vmem:[#allocation2 + $0x148] sm:$0xff]
          %v1208 = vld [vmem:[#allocation2 + $0x150] sm:$0xff]
          %v1209 = vld [vmem:[#allocation2 + $0x158] sm:$0xff]
          %v1210 = vld [vmem:[#allocation2 + $0x160] sm:$0xff]
          %v1211 = vld [vmem:[#allocation2 + $0x168] sm:$0xff]
          %v1212 = vld [vmem:[#allocation2 + $0x170] sm:$0xff]
          %v1213 = vld [vmem:[#allocation2 + $0x178] sm:$0xff]
          %v1214 = vld [vmem:[#allocation2 + $0x180] sm:$0xff]
          %v1215 = vld [vmem:[#allocation2 + $0x188] sm:$0xff]
          %v1216 = vld [vmem:[#allocation2 + $0x190] sm:$0xff]
          %v1217 = vld [vmem:[#allocation2 + $0x198] sm:$0xff]
          %v1218 = vld [vmem:[#allocation2 + $0x1a0] sm:$0xff]
          %v1219 = vld [vmem:[#allocation2 + $0x1a8] sm:$0xff]
          %v1220 = vld [vmem:[#allocation2 + $0x1b0] sm:$0xff]
          %v1221 = vld [vmem:[#allocation2 + $0x1b8] sm:$0xff]
          %v1222 = vld [vmem:[#allocation2 + $0x1c0] sm:$0xff]
          %v1223 = vld [vmem:[#allocation2 + $0x1c8] sm:$0xff]
          %v1224 = vld [vmem:[#allocation2 + $0x1d0] sm:$0xff]
          %v1225 = vld [vmem:[#allocation2 + $0x1d8] sm:$0xff]
          %v1226 = vld [vmem:[#allocation2 + $0x1e0] sm:$0xff]
          %v1227 = vld [vmem:[#allocation2 + $0x1e8] sm:$0xff]
          %v1228 = vld [vmem:[#allocation2 + $0x1f0] sm:$0xff]
          %v1229 = vld [vmem:[#allocation2 + $0x1f8] sm:$0xff]
          %v1230 = vld [vmem:[%s260] sm:$0x1]
          %v1232 = vlaneseq
          %v1233 = vshrl.u32 %v1232, 7
          %v1234 = vsub.s32 0, %v1233
          %v1235 = vrot.slane %v1230, %v1234
          %v1237 = vadd.f32 %v1166, %v1235
          %v1238 = vadd.f32 %v1167, %v1235
          %v1239 = vadd.f32 %v1168, %v1235
          %v1240 = vadd.f32 %v1169, %v1235
          %v1241 = vadd.f32 %v1170, %v1235
          %v1242 = vadd.f32 %v1171, %v1235
          %v1243 = vadd.f32 %v1172, %v1235
          %v1244 = vadd.f32 %v1173, %v1235
          %v1245 = vadd.f32 %v1174, %v1235
          %v1246 = vadd.f32 %v1175, %v1235
          %v1247 = vadd.f32 %v1176, %v1235
          %v1248 = vadd.f32 %v1177, %v1235
          %v1249 = vadd.f32 %v1178, %v1235
          %v1250 = vadd.f32 %v1179, %v1235
          %v1251 = vadd.f32 %v1180, %v1235
          %v1252 = vadd.f32 %v1181, %v1235
          %v1253 = vadd.f32 %v1182, %v1235
          %v1254 = vadd.f32 %v1183, %v1235
          %v1255 = vadd.f32 %v1184, %v1235
          %v1256 = vadd.f32 %v1185, %v1235
          %v1257 = vadd.f32 %v1186, %v1235
          %v1258 = vadd.f32 %v1187, %v1235
          %v1259 = vadd.f32 %v1188, %v1235
          %v1260 = vadd.f32 %v1189, %v1235
          %v1261 = vadd.f32 %v1190, %v1235
          %v1262 = vadd.f32 %v1191, %v1235
          %v1263 = vadd.f32 %v1192, %v1235
          %v1264 = vadd.f32 %v1193, %v1235
          %v1265 = vadd.f32 %v1194, %v1235
          %v1266 = vadd.f32 %v1195, %v1235
          %v1267 = vadd.f32 %v1196, %v1235
          %v1268 = vadd.f32 %v1197, %v1235
          %v1269 = vadd.f32 %v1198, %v1235
          %v1270 = vadd.f32 %v1199, %v1235
          %v1271 = vadd.f32 %v1200, %v1235
          %v1272 = vadd.f32 %v1201, %v1235
          %v1273 = vadd.f32 %v1202, %v1235
          %v1274 = vadd.f32 %v1203, %v1235
          %v1275 = vadd.f32 %v1204, %v1235
          %v1276 = vadd.f32 %v1205, %v1235
          %v1277 = vadd.f32 %v1206, %v1235
          %v1278 = vadd.f32 %v1207, %v1235
          %v1279 = vadd.f32 %v1208, %v1235
          %v1280 = vadd.f32 %v1209, %v1235
          %v1281 = vadd.f32 %v1210, %v1235
          %v1282 = vadd.f32 %v1211, %v1235
          %v1283 = vadd.f32 %v1212, %v1235
          %v1284 = vadd.f32 %v1213, %v1235
          %v1285 = vadd.f32 %v1214, %v1235
          %v1286 = vadd.f32 %v1215, %v1235
          %v1287 = vadd.f32 %v1216, %v1235
          %v1288 = vadd.f32 %v1217, %v1235
          %v1289 = vadd.f32 %v1218, %v1235
          %v1290 = vadd.f32 %v1219, %v1235
          %v1291 = vadd.f32 %v1220, %v1235
          %v1292 = vadd.f32 %v1221, %v1235
          %v1293 = vadd.f32 %v1222, %v1235
          %v1294 = vadd.f32 %v1223, %v1235
          %v1295 = vadd.f32 %v1224, %v1235
          %v1296 = vadd.f32 %v1225, %v1235
          %v1297 = vadd.f32 %v1226, %v1235
          %v1298 = vadd.f32 %v1227, %v1235
          %v1299 = vadd.f32 %v1228, %v1235
          %v1300 = vadd.f32 %v1229, %v1235
          %v1301 = vmax.f32 %v1237, 0.0
          %v1302 = vmax.f32 %v1238, 0.0
          %v1303 = vmax.f32 %v1239, 0.0
          %v1304 = vmax.f32 %v1240, 0.0
          %v1305 = vmax.f32 %v1241, 0.0
          %v1306 = vmax.f32 %v1242, 0.0
          %v1307 = vmax.f32 %v1243, 0.0
          %v1308 = vmax.f32 %v1244, 0.0
          %v1309 = vmax.f32 %v1245, 0.0
          %v1310 = vmax.f32 %v1246, 0.0
          %v1311 = vmax.f32 %v1247, 0.0
          %v1312 = vmax.f32 %v1248, 0.0
          %v1313 = vmax.f32 %v1249, 0.0
          %v1314 = vmax.f32 %v1250, 0.0
          %v1315 = vmax.f32 %v1251, 0.0
          %v1316 = vmax.f32 %v1252, 0.0
          %v1317 = vmax.f32 %v1253, 0.0
          %v1318 = vmax.f32 %v1254, 0.0
          %v1319 = vmax.f32 %v1255, 0.0
          %v1320 = vmax.f32 %v1256, 0.0
          %v1321 = vmax.f32 %v1257, 0.0
          %v1322 = vmax.f32 %v1258, 0.0
          %v1323 = vmax.f32 %v1259, 0.0
          %v1324 = vmax.f32 %v1260, 0.0
          %v1325 = vmax.f32 %v1261, 0.0
          %v1326 = vmax.f32 %v1262, 0.0
          %v1327 = vmax.f32 %v1263, 0.0
          %v1328 = vmax.f32 %v1264, 0.0
          %v1329 = vmax.f32 %v1265, 0.0
          %v1330 = vmax.f32 %v1266, 0.0
          %v1331 = vmax.f32 %v1267, 0.0
          %v1332 = vmax.f32 %v1268, 0.0
          %v1333 = vmax.f32 %v1269, 0.0
          %v1334 = vmax.f32 %v1270, 0.0
          %v1335 = vmax.f32 %v1271, 0.0
          %v1336 = vmax.f32 %v1272, 0.0
          %v1337 = vmax.f32 %v1273, 0.0
          %v1338 = vmax.f32 %v1274, 0.0
          %v1339 = vmax.f32 %v1275, 0.0
          %v1340 = vmax.f32 %v1276, 0.0
          %v1341 = vmax.f32 %v1277, 0.0
          %v1342 = vmax.f32 %v1278, 0.0
          %v1343 = vmax.f32 %v1279, 0.0
          %v1344 = vmax.f32 %v1280, 0.0
          %v1345 = vmax.f32 %v1281, 0.0
          %v1346 = vmax.f32 %v1282, 0.0
          %v1347 = vmax.f32 %v1283, 0.0
          %v1348 = vmax.f32 %v1284, 0.0
          %v1349 = vmax.f32 %v1285, 0.0
          %v1350 = vmax.f32 %v1286, 0.0
          %v1351 = vmax.f32 %v1287, 0.0
          %v1352 = vmax.f32 %v1288, 0.0
          %v1353 = vmax.f32 %v1289, 0.0
          %v1354 = vmax.f32 %v1290, 0.0
          %v1355 = vmax.f32 %v1291, 0.0
          %v1356 = vmax.f32 %v1292, 0.0
          %v1357 = vmax.f32 %v1293, 0.0
          %v1358 = vmax.f32 %v1294, 0.0
          %v1359 = vmax.f32 %v1295, 0.0
          %v1360 = vmax.f32 %v1296, 0.0
          %v1361 = vmax.f32 %v1297, 0.0
          %v1362 = vmax.f32 %v1298, 0.0
          %v1363 = vmax.f32 %v1299, 0.0
          %v1364 = vmax.f32 %v1300, 0.0
          %v1365 = vpack.c.bf16 %v1302, %v1301
          %v1366 = vpack.c.bf16 %v1304, %v1303
          %v1367 = vpack.c.bf16 %v1306, %v1305
          %v1368 = vpack.c.bf16 %v1308, %v1307
          %v1369 = vpack.c.bf16 %v1310, %v1309
          %v1370 = vpack.c.bf16 %v1312, %v1311
          %v1371 = vpack.c.bf16 %v1314, %v1313
          %v1372 = vpack.c.bf16 %v1316, %v1315
          %v1373 = vpack.c.bf16 %v1318, %v1317
          %v1374 = vpack.c.bf16 %v1320, %v1319
          %v1375 = vpack.c.bf16 %v1322, %v1321
          %v1376 = vpack.c.bf16 %v1324, %v1323
          %v1377 = vpack.c.bf16 %v1326, %v1325
          %v1378 = vpack.c.bf16 %v1328, %v1327
          %v1379 = vpack.c.bf16 %v1330, %v1329
          %v1380 = vpack.c.bf16 %v1332, %v1331
          %v1381 = vpack.c.bf16 %v1334, %v1333
          %v1382 = vpack.c.bf16 %v1336, %v1335
          %v1383 = vpack.c.bf16 %v1338, %v1337
          %v1384 = vpack.c.bf16 %v1340, %v1339
          %v1385 = vpack.c.bf16 %v1342, %v1341
          %v1386 = vpack.c.bf16 %v1344, %v1343
          %v1387 = vpack.c.bf16 %v1346, %v1345
          %v1388 = vpack.c.bf16 %v1348, %v1347
          %v1389 = vpack.c.bf16 %v1350, %v1349
          %v1390 = vpack.c.bf16 %v1352, %v1351
          %v1391 = vpack.c.bf16 %v1354, %v1353
          %v1392 = vpack.c.bf16 %v1356, %v1355
          %v1393 = vpack.c.bf16 %v1358, %v1357
          %v1394 = vpack.c.bf16 %v1360, %v1359
          %v1395 = vpack.c.bf16 %v1362, %v1361
          %v1396 = vpack.c.bf16 %v1364, %v1363
          %v1429 = vunpack.c.l.b16 %v1365
          %v1430 = vunpack.c.h.b16 %v1365
          %v1431 = vunpack.c.l.b16 %v1366
          %v1432 = vunpack.c.h.b16 %v1366
          %v1433 = vunpack.c.l.b16 %v1367
          %v1434 = vunpack.c.h.b16 %v1367
          %v1435 = vunpack.c.l.b16 %v1368
          %v1436 = vunpack.c.h.b16 %v1368
          %v1437 = vunpack.c.l.b16 %v1369
          %v1438 = vunpack.c.h.b16 %v1369
          %v1439 = vunpack.c.l.b16 %v1370
          %v1440 = vunpack.c.h.b16 %v1370
          %v1441 = vunpack.c.l.b16 %v1371
          %v1442 = vunpack.c.h.b16 %v1371
          %v1443 = vunpack.c.l.b16 %v1372
          %v1444 = vunpack.c.h.b16 %v1372
          %v1445 = vunpack.c.l.b16 %v1373
          %v1446 = vunpack.c.h.b16 %v1373
          %v1447 = vunpack.c.l.b16 %v1374
          %v1448 = vunpack.c.h.b16 %v1374
          %v1449 = vunpack.c.l.b16 %v1375
          %v1450 = vunpack.c.h.b16 %v1375
          %v1451 = vunpack.c.l.b16 %v1376
          %v1452 = vunpack.c.h.b16 %v1376
          %v1453 = vunpack.c.l.b16 %v1377
          %v1454 = vunpack.c.h.b16 %v1377
          %v1455 = vunpack.c.l.b16 %v1378
          %v1456 = vunpack.c.h.b16 %v1378
          %v1457 = vunpack.c.l.b16 %v1379
          %v1458 = vunpack.c.h.b16 %v1379
          %v1459 = vunpack.c.l.b16 %v1380
          %v1460 = vunpack.c.h.b16 %v1380
          %v1461 = vunpack.c.l.b16 %v1381
          %v1462 = vunpack.c.h.b16 %v1381
          %v1463 = vunpack.c.l.b16 %v1382
          %v1464 = vunpack.c.h.b16 %v1382
          %v1465 = vunpack.c.l.b16 %v1383
          %v1466 = vunpack.c.h.b16 %v1383
          %v1467 = vunpack.c.l.b16 %v1384
          %v1468 = vunpack.c.h.b16 %v1384
          %v1469 = vunpack.c.l.b16 %v1385
          %v1470 = vunpack.c.h.b16 %v1385
          %v1471 = vunpack.c.l.b16 %v1386
          %v1472 = vunpack.c.h.b16 %v1386
          %v1473 = vunpack.c.l.b16 %v1387
          %v1474 = vunpack.c.h.b16 %v1387
          %v1475 = vunpack.c.l.b16 %v1388
          %v1476 = vunpack.c.h.b16 %v1388
          %v1477 = vunpack.c.l.b16 %v1389
          %v1478 = vunpack.c.h.b16 %v1389
          %v1479 = vunpack.c.l.b16 %v1390
          %v1480 = vunpack.c.h.b16 %v1390
          %v1481 = vunpack.c.l.b16 %v1391
          %v1482 = vunpack.c.h.b16 %v1391
          %v1483 = vunpack.c.l.b16 %v1392
          %v1484 = vunpack.c.h.b16 %v1392
          %v1485 = vunpack.c.l.b16 %v1393
          %v1486 = vunpack.c.h.b16 %v1393
          %v1487 = vunpack.c.l.b16 %v1394
          %v1488 = vunpack.c.h.b16 %v1394
          %v1489 = vunpack.c.l.b16 %v1395
          %v1490 = vunpack.c.h.b16 %v1395
          %v1491 = vunpack.c.l.b16 %v1396
          %v1492 = vunpack.c.h.b16 %v1396
          %v1493 = vpack.c.b16 %v1429, %v1429
          %v1494 = vpack.c.b16 %v1430, %v1430
          %v1495 = vpack.c.b16 %v1431, %v1431
          %v1496 = vpack.c.b16 %v1432, %v1432
          %v1497 = vpack.c.b16 %v1433, %v1433
          %v1498 = vpack.c.b16 %v1434, %v1434
          %v1499 = vpack.c.b16 %v1435, %v1435
          %v1500 = vpack.c.b16 %v1436, %v1436
          %v1501 = vpack.c.b16 %v1437, %v1437
          %v1502 = vpack.c.b16 %v1438, %v1438
          %v1503 = vpack.c.b16 %v1439, %v1439
          %v1504 = vpack.c.b16 %v1440, %v1440
          %v1505 = vpack.c.b16 %v1441, %v1441
          %v1506 = vpack.c.b16 %v1442, %v1442
          %v1507 = vpack.c.b16 %v1443, %v1443
          %v1508 = vpack.c.b16 %v1444, %v1444
          %v1509 = vpack.c.b16 %v1445, %v1445
          %v1510 = vpack.c.b16 %v1446, %v1446
          %v1511 = vpack.c.b16 %v1447, %v1447
          %v1512 = vpack.c.b16 %v1448, %v1448
          %v1513 = vpack.c.b16 %v1449, %v1449
          %v1514 = vpack.c.b16 %v1450, %v1450
          %v1515 = vpack.c.b16 %v1451, %v1451
          %v1516 = vpack.c.b16 %v1452, %v1452
          %v1517 = vpack.c.b16 %v1453, %v1453
          %v1518 = vpack.c.b16 %v1454, %v1454
          %v1519 = vpack.c.b16 %v1455, %v1455
          %v1520 = vpack.c.b16 %v1456, %v1456
          %v1521 = vpack.c.b16 %v1457, %v1457
          %v1522 = vpack.c.b16 %v1458, %v1458
          %v1523 = vpack.c.b16 %v1459, %v1459
          %v1524 = vpack.c.b16 %v1460, %v1460
          %v1525 = vpack.c.b16 %v1461, %v1461
          %v1526 = vpack.c.b16 %v1462, %v1462
          %v1527 = vpack.c.b16 %v1463, %v1463
          %v1528 = vpack.c.b16 %v1464, %v1464
          %v1529 = vpack.c.b16 %v1465, %v1465
          %v1530 = vpack.c.b16 %v1466, %v1466
          %v1531 = vpack.c.b16 %v1467, %v1467
          %v1532 = vpack.c.b16 %v1468, %v1468
          %v1533 = vpack.c.b16 %v1469, %v1469
          %v1534 = vpack.c.b16 %v1470, %v1470
          %v1535 = vpack.c.b16 %v1471, %v1471
          %v1536 = vpack.c.b16 %v1472, %v1472
          %v1537 = vpack.c.b16 %v1473, %v1473
          %v1538 = vpack.c.b16 %v1474, %v1474
          %v1539 = vpack.c.b16 %v1475, %v1475
          %v1540 = vpack.c.b16 %v1476, %v1476
          %v1541 = vpack.c.b16 %v1477, %v1477
          %v1542 = vpack.c.b16 %v1478, %v1478
          %v1543 = vpack.c.b16 %v1479, %v1479
          %v1544 = vpack.c.b16 %v1480, %v1480
          %v1545 = vpack.c.b16 %v1481, %v1481
          %v1546 = vpack.c.b16 %v1482, %v1482
          %v1547 = vpack.c.b16 %v1483, %v1483
          %v1548 = vpack.c.b16 %v1484, %v1484
          %v1549 = vpack.c.b16 %v1485, %v1485
          %v1550 = vpack.c.b16 %v1486, %v1486
          %v1551 = vpack.c.b16 %v1487, %v1487
          %v1552 = vpack.c.b16 %v1488, %v1488
          %v1553 = vpack.c.b16 %v1489, %v1489
          %v1554 = vpack.c.b16 %v1490, %v1490
          %v1555 = vpack.c.b16 %v1491, %v1491
          %v1556 = vpack.c.b16 %v1492, %v1492
          %1621 = vst [vmem:[%s268] sm:$0xf] %v1493
          %1622 = vst [vmem:[%s268 + $0x4] sm:$0xf] %v1494
          %1623 = vst [vmem:[%s268 + $0x8] sm:$0xf] %v1495
          %1624 = vst [vmem:[%s268 + $0xc] sm:$0xf] %v1496
          %1625 = vst [vmem:[%s268 + $0x10] sm:$0xf] %v1497
          %1626 = vst [vmem:[%s268 + $0x14] sm:$0xf] %v1498
          %1627 = vst [vmem:[%s268 + $0x18] sm:$0xf] %v1499
          %1628 = vst [vmem:[%s268 + $0x1c] sm:$0xf] %v1500
          %1629 = vst [vmem:[%s268 + $0x20] sm:$0xf] %v1501
          %1630 = vst [vmem:[%s268 + $0x24] sm:$0xf] %v1502
          %1631 = vst [vmem:[%s268 + $0x28] sm:$0xf] %v1503
          %1632 = vst [vmem:[%s268 + $0x2c] sm:$0xf] %v1504
          %1633 = vst [vmem:[%s268 + $0x30] sm:$0xf] %v1505
          %1634 = vst [vmem:[%s268 + $0x34] sm:$0xf] %v1506
          %1635 = vst [vmem:[%s268 + $0x38] sm:$0xf] %v1507
          %1636 = vst [vmem:[%s268 + $0x3c] sm:$0xf] %v1508
          %1637 = vst [vmem:[%s268 + $0x40] sm:$0xf] %v1509
          %1638 = vst [vmem:[%s268 + $0x44] sm:$0xf] %v1510
          %1639 = vst [vmem:[%s268 + $0x48] sm:$0xf] %v1511
          %1640 = vst [vmem:[%s268 + $0x4c] sm:$0xf] %v1512
          %1641 = vst [vmem:[%s268 + $0x50] sm:$0xf] %v1513
          %1642 = vst [vmem:[%s268 + $0x54] sm:$0xf] %v1514
          %1643 = vst [vmem:[%s268 + $0x58] sm:$0xf] %v1515
          %1644 = vst [vmem:[%s268 + $0x5c] sm:$0xf] %v1516
          %1645 = vst [vmem:[%s268 + $0x60] sm:$0xf] %v1517
          %1646 = vst [vmem:[%s268 + $0x64] sm:$0xf] %v1518
          %1647 = vst [vmem:[%s268 + $0x68] sm:$0xf] %v1519
          %1648 = vst [vmem:[%s268 + $0x6c] sm:$0xf] %v1520
          %1649 = vst [vmem:[%s268 + $0x70] sm:$0xf] %v1521
          %1650 = vst [vmem:[%s268 + $0x74] sm:$0xf] %v1522
          %1651 = vst [vmem:[%s268 + $0x78] sm:$0xf] %v1523
          %1652 = vst [vmem:[%s268 + $0x7c] sm:$0xf] %v1524
          %1653 = vst [vmem:[%s268 + $0x80] sm:$0xf] %v1525
          %1654 = vst [vmem:[%s268 + $0x84] sm:$0xf] %v1526
          %1655 = vst [vmem:[%s268 + $0x88] sm:$0xf] %v1527
          %1656 = vst [vmem:[%s268 + $0x8c] sm:$0xf] %v1528
          %1657 = vst [vmem:[%s268 + $0x90] sm:$0xf] %v1529
          %1658 = vst [vmem:[%s268 + $0x94] sm:$0xf] %v1530
          %1659 = vst [vmem:[%s268 + $0x98] sm:$0xf] %v1531
          %1660 = vst [vmem:[%s268 + $0x9c] sm:$0xf] %v1532
          %1661 = vst [vmem:[%s268 + $0xa0] sm:$0xf] %v1533
          %1662 = vst [vmem:[%s268 + $0xa4] sm:$0xf] %v1534
          %1663 = vst [vmem:[%s268 + $0xa8] sm:$0xf] %v1535
          %1664 = vst [vmem:[%s268 + $0xac] sm:$0xf] %v1536
          %1665 = vst [vmem:[%s268 + $0xb0] sm:$0xf] %v1537
          %1666 = vst [vmem:[%s268 + $0xb4] sm:$0xf] %v1538
          %1667 = vst [vmem:[%s268 + $0xb8] sm:$0xf] %v1539
          %1668 = vst [vmem:[%s268 + $0xbc] sm:$0xf] %v1540
          %1669 = vst [vmem:[%s268 + $0xc0] sm:$0xf] %v1541
          %1670 = vst [vmem:[%s268 + $0xc4] sm:$0xf] %v1542
          %1671 = vst [vmem:[%s268 + $0xc8] sm:$0xf] %v1543
          %1672 = vst [vmem:[%s268 + $0xcc] sm:$0xf] %v1544
          %1673 = vst [vmem:[%s268 + $0xd0] sm:$0xf] %v1545
          %1674 = vst [vmem:[%s268 + $0xd4] sm:$0xf] %v1546
          %1675 = vst [vmem:[%s268 + $0xd8] sm:$0xf] %v1547
          %1676 = vst [vmem:[%s268 + $0xdc] sm:$0xf] %v1548
          %1677 = vst [vmem:[%s268 + $0xe0] sm:$0xf] %v1549
          %1678 = vst [vmem:[%s268 + $0xe4] sm:$0xf] %v1550
          %1679 = vst [vmem:[%s268 + $0xe8] sm:$0xf] %v1551
          %1680 = vst [vmem:[%s268 + $0xec] sm:$0xf] %v1552
          %1681 = vst [vmem:[%s268 + $0xf0] sm:$0xf] %v1553
          %1682 = vst [vmem:[%s268 + $0xf4] sm:$0xf] %v1554
          %1683 = vst [vmem:[%s268 + $0xf8] sm:$0xf] %v1555
          %1684 = vst [vmem:[%s268 + $0xfc] sm:$0xf] %v1556
        $region44: #{matmul_bias_act.1} parent=31 // pred_fallthru
          _
        %s1685 = smul.u32 64, %s22
        %p1686 = scmp.lt.s32.totalorder %s1685, 6271
        %s1687 = scalar_select %p1686, %s1685, 6271
        %p1688 = scmp.lt.s32.totalorder %s23, 0
        %s1689 = scalar_select %p1688, %s23, 0
        %s1690 = sadd.s32 %s1689, %s1687
        %s1691 = smul.addr %s1690, 4
        %s1692 = scalar_lea.vmem %s3, %s1691
        // Predicated region
        $region45: #{matmul_bias_act.1} parent=31 // pred_check
          %p1693 = pneg %p138
        $region46: #{matmul_bias_act.1} parent=31 // pred_check_branch
          %1695 = sbr.rel (%p1693) target = $region48
        $region47: #{matmul_bias_act.1} parent=31 // pred_region
          %s1696 = smul.u32 64, %s22
        $region48: #{matmul_bias_act.1} parent=31 // pred_fallthru
          _
      $region32: #{matmul_bias_act.1} parent=5 // pred_fallthru
        _
      %p1697 = scmp.le.s32.totalorder 2, %s12
      // Predicated region
      $region49: #{matmul_bias_act.1} parent=5 // pred_check
        %p1698 = pneg %p1697
      $region50: #{matmul_bias_act.1} parent=5 // pred_check_branch
        %1700 = sbr.rel (%p1698) target = $region52
      $region51: #{matmul_bias_act.1} parent=5 // pred_region
        %s1701 = ssub.s32 %s12, 2
        // Predicated region
        $region53: #{matmul_bias_act.1} parent=51 // pred_check
          %p1702 = pneg %p144
        $region54: #{matmul_bias_act.1} parent=51 // pred_check_branch
          %1704 = sbr.rel (%p1702) target = $region56
        $region55: #{matmul_bias_act.1} parent=51 // pred_region
          %s1705 = smul.u32 64, %s25
          %p1706 = scmp.lt.s32.totalorder %s1705, 6271
          %s1707 = scalar_select %p1706, %s1705, 6271
          %p1708 = scmp.lt.s32.totalorder %s26, 0
          %s1709 = scalar_select %p1708, %s26, 0
          %s1710 = sadd.s32 %s1709, %s1707
          %s1711 = smul.addr %s1710, 4
          %s1712 = scalar_lea.vmem %s3, %s1711
        $region56: #{matmul_bias_act.1} parent=51 // pred_fallthru
          _
      $region52: #{matmul_bias_act.1} parent=5 // pred_fallthru
        _
    $region6: #{matmul_bias_act.1} parent=1 // loop_footer
      %s16 = sadd.s32 1, %s12
    $region7: #{matmul_bias_act.1} parent=1 // loop_footer_branch
      %11 = sbr.rel target = $region3
    $region8: #{matmul_bias_act.1} parent=1 // loop_exit
      _
    %1713 = vsyncpa [#allocation4], 1
    %s1714 = scalar_lea.sflag [#allocation4], 1
    %1715 = vsyncpa %s1714, 1

</llo_original>
